<compile_context>
chip_gen: v7x
topology: tpu7x:2x2x1
jax: 0.10.0
libtpu: 0.0.40
codegen_flags: <defaults>
</compile_context>

<pallas_src>
import functools

import jax
import jax.numpy as jnp
from jax.experimental import pallas as pl
from jax.experimental.pallas import tpu as pltpu


# ------------------------------- helpers ------------------------------------


def _round_up(v, m):
    return ((v + m - 1) // m) * m


def _pad2(a, rows, cols):
    return jnp.pad(a, ((0, rows - a.shape[0]), (0, cols - a.shape[1])))


def _vmem_budget_bytes():
    """Physical VMEM per TensorCore (generation aware), safe fallback = 64 MiB."""
    try:
        return int(pltpu.get_tpu_info().vmem_capacity_bytes)
    except Exception:
        return 64 * 1024 * 1024


# ----------------------------- Pallas kernels -------------------------------


def _fused_gin_kernel(*refs, layer_relu):
    """All GIN layers in one kernel invocation.

    A lives in VMEM once and is reused by every layer; intermediate H stays
    on-chip.  refs = (a_ref, x_ref, (w1, b1, w2, b2) * L, o_ref).

    Padded rows of H become nonzero after layer 1 (bias/ReLU of zero input);
    this is harmless because the padded COLUMNS of A are zero, so padded rows
    never contaminate real rows.  Padded feature columns stay exactly zero.
    """
    a_ref, x_ref = refs[0], refs[1]
    o_ref = refs[-1]
    w_refs = refs[2:-1]

    a = a_ref[...]
    h = x_ref[...]
    n_layers = len(layer_relu)
    for li, relu in enumerate(layer_relu):
        w1 = w_refs[4 * li][...]
        b1 = w_refs[4 * li + 1][...]
        w2 = w_refs[4 * li + 2][...]
        b2 = w_refs[4 * li + 3][...]
        # aggregation + self term in one MXU pass: z = (A + (1+eps)I) @ H
        z = jnp.dot(a, h, preferred_element_type=jnp.float32)
        # Linear1 (+ folded eval-mode BatchNorm) (+ ReLU)
        hh = jnp.dot(z.astype(jnp.bfloat16), w1,
                     preferred_element_type=jnp.float32) + b1
        if relu:
            hh = jnp.maximum(hh, 0.0)
        # Linear2 (+ ReLU)
        o = jnp.dot(hh.astype(jnp.bfloat16), w2,
                    preferred_element_type=jnp.float32) + b2
        if relu:
            o = jnp.maximum(o, 0.0)
        if li == n_layers - 1:
            o_ref[...] = o.astype(o_ref.dtype)
        else:
            h = o.astype(jnp.bfloat16)


def _gin_layer_kernel(a_ref, x_ref, w1_ref, b1_ref, w2_ref, b2_ref, o_ref, *,
                      relu):
    """Row-tiled single-layer fallback (BN already folded into w1/b1)."""
    z = jnp.dot(a_ref[...], x_ref[...], preferred_element_type=jnp.float32)
    h = jnp.dot(z.astype(jnp.bfloat16), w1_ref[...],
                preferred_element_type=jnp.float32) + b1_ref[...]
    if relu:
        h = jnp.maximum(h, 0.0)
    o = jnp.dot(h.astype(jnp.bfloat16), w2_ref[...],
                preferred_element_type=jnp.float32) + b2_ref[...]
    if relu:
        o = jnp.maximum(o, 0.0)
    o_ref[...] = o.astype(o_ref.dtype)


# ------------------------------ pallas calls ---------------------------------


def _gin_fused_call(a_pad, h0, params, *, out_dtype, vmem_limit):
    npad = a_pad.shape[0]
    out_dim_p = params[-1]["w2"].shape[1]

    operands = [a_pad, h0]
    layer_relu = []
    for lp in params:
        operands += [lp["w1"], lp["b1"], lp["w2"], lp["b2"]]
        layer_relu.append(not lp["final"])

    kernel = functools.partial(_fused_gin_kernel, layer_relu=tuple(layer_relu))
    vmem_spec = pl.BlockSpec(memory_space=pltpu.MemorySpace.VMEM)

    return pl.pallas_call(
        kernel,
        in_specs=[vmem_spec] * len(operands),
        out_specs=vmem_spec,
        out_shape=jax.ShapeDtypeStruct((npad, out_dim_p), out_dtype),
        compiler_params=pltpu.CompilerParams(vmem_limit_bytes=vmem_limit),
    )(*operands)


def _gin_layer_call(a_pad, h, lp, *, tm, out_dtype, vmem_limit):
    """One GINConv layer over the whole (padded) graph, row-tiled (fallback)."""
    npad = a_pad.shape[0]
    fin = h.shape[1]
    fout = lp["w2"].shape[1]
    grid = (npad // tm,)

    kernel = functools.partial(_gin_layer_kernel, relu=not lp["final"])
    operands = (a_pad, h, lp["w1"], lp["b1"], lp["w2"], lp["b2"])

    in_specs = [
        pl.BlockSpec((tm, npad), lambda i: (i, 0)),   # A row slab, pipelined
        pl.BlockSpec((npad, fin), lambda i: (0, 0)),  # full X, VMEM-resident
    ]
    # weights / biases: full arrays, same block every step
    in_specs += [pl.BlockSpec(op.shape, lambda i: (0, 0)) for op in operands[2:]]
    out_specs = pl.BlockSpec((tm, fout), lambda i: (i, 0))

    return pl.pallas_call(
        kernel,
        grid=grid,
        in_specs=in_specs,
        out_specs=out_specs,
        out_shape=jax.ShapeDtypeStruct((npad, fout), out_dtype),
        compiler_params=pltpu.CompilerParams(
            dimension_semantics=("parallel",),
            vmem_limit_bytes=vmem_limit),
    )(*operands)


# ------------------------------- glue (JAX) ----------------------------------


def build_gin_adjacency_padded(edge_index, num_nodes, npad, eps=0.0):
    """Dense (A + (1+eps) I) built directly at padded size.

    A[i, j] = #edges j -> i (PyG source->target).  Padded rows/cols (and the
    padded part of the diagonal) are zero.  Intended to be built once and
    cached across forward calls.
    """
    src, dst = edge_index[0], edge_index[1]
    a = jnp.zeros((npad, npad), jnp.float32)
    a = a.at[dst, src].add(1.0)                       # multi-edges accumulate
    diag = jnp.arange(num_nodes)
    a = a.at[diag, diag].add(1.0 + eps)
    return a.astype(jnp.bfloat16)


def init_gin_encoder_params(key, num_layers, in_c, hid_c, out_c, bn_eps=1e-5):
    """Per-layer params.  Eval-mode BN is folded into Linear1 (w1' = w1*s,
    b1' = b1*s + t).  Padded bf16/f32 copies for the kernel + raw f32 copies
    (already folded) for the pure-JAX reference."""
    if num_layers == 1:
        specs = [(in_c, hid_c, out_c, False)]
    else:
        specs = [(in_c, hid_c, hid_c, False)]
        specs += [(hid_c, hid_c, hid_c, False)] * (num_layers - 2)
        specs += [(hid_c, hid_c, out_c, True)]

    params = []
    keys = jax.random.split(key, len(specs))
    for k, (din, dh, dout, is_final) in zip(keys, specs):
        k1, k2, k3, k4, k5, k6, k7, k8 = jax.random.split(k, 8)
        lim1 = 1.0 / jnp.sqrt(float(din))
        w1 = jax.random.uniform(k1, (din, dh), jnp.float32, -lim1, lim1)
        b1 = jax.random.uniform(k2, (dh,), jnp.float32, -lim1, lim1)
        lim2 = 1.0 / jnp.sqrt(float(dh))
        w2 = jax.random.uniform(k3, (dh, dout), jnp.float32, -lim2, lim2)
        b2 = jax.random.uniform(k4, (dout,), jnp.float32, -lim2, lim2)

        if not is_final:
            gamma = jax.random.uniform(k5, (dh,), jnp.float32, 0.5, 1.5)
            beta = jax.random.uniform(k6, (dh,), jnp.float32, -0.1, 0.1)
            mean = 0.1 * jax.random.normal(k7, (dh,), jnp.float32)
            var = jax.random.uniform(k8, (dh,), jnp.float32, 0.5, 1.5)
            s = gamma / jnp.sqrt(var + bn_eps)            # folded eval-mode BN
            t = beta - mean * s
            w1 = w1 * s[None, :]                          # fold BN into Linear1
            b1 = b1 * s + t

        din_p, dh_p, dout_p = (_round_up(d, 128) for d in (din, dh, dout))
        params.append({
            "final": is_final,
            "out_dim": dout,
            "w1": _pad2(w1, din_p, dh_p).astype(jnp.bfloat16),
            "b1": _pad2(b1[None, :], 1, dh_p),
            "w2": _pad2(w2, dh_p, dout_p).astype(jnp.bfloat16),
            "b2": _pad2(b2[None, :], 1, dout_p),
            "raw_w1": w1, "raw_b1": b1, "raw_w2": w2, "raw_b2": b2,
        })
    return params


def gin_encoder_forward(x, edge_index, params, *, eps=0.0, a_pad=None):
    """Full GINEncoder forward.

    Small/medium graphs (A + activations fit in VMEM): one fused Pallas call
    for all layers.  Larger graphs: one row-tiled Pallas call per layer.
    """
    n, fin = x.shape
    if a_pad is not None:
        npad = a_pad.shape[0]
    else:
        npad = _round_up(max(n, 128), 128)    # 128-aligned rows (bf16 tile-safe)
        a_pad = build_gin_adjacency_padded(edge_index, n, npad, eps=eps)
    fin_p = _round_up(fin, 128)
    h = _pad2(x.astype(jnp.float32), npad, fin_p).astype(jnp.bfloat16)

    vmem_cap = _vmem_budget_bytes()
    vmem_limit = min(int(vmem_cap * 0.9), 112 * 1024 * 1024)

    # fused-path VMEM estimate: A + a few widest activation buffers + weights
    max_fp = max([fin_p] + [lp["w1"].shape[1] for lp in params]
                 + [lp["w2"].shape[1] for lp in params])
    weight_bytes = sum(lp["w1"].size * 2 + lp["w2"].size * 2
                       + lp["b1"].size * 4 + lp["b2"].size * 4 for lp in params)
    fused_bytes = npad * npad * 2 + 4 * npad * max_fp * 4 + weight_bytes

    if fused_bytes <= int(vmem_cap * 0.7):
        out = _gin_fused_call(a_pad, h, params, out_dtype=jnp.float32,
                              vmem_limit=vmem_limit)
    else:
        # Fallback: A re-streamed once per layer, row-tiled "parallel" grid.
        tm = 256 if npad % 256 == 0 else 128
        num_layers = len(params)
        out = h
        for li, lp in enumerate(params):
            out_dtype = jnp.float32 if li == num_layers - 1 else jnp.bfloat16
            out = _gin_layer_call(a_pad, out, lp, tm=tm, out_dtype=out_dtype,
                                  vmem_limit=vmem_limit)
    return out[:n, :params[-1]["out_dim"]]


def reference_forward(x, edge_index, params, *, eps=0.0):
    """Pure-JAX reference mirroring the kernel's bf16-matmul / f32-accumulate
    policy (BN already folded into raw_w1/raw_b1)."""
    hp = jax.lax.Precision.HIGHEST
    bf = lambda v: v.astype(jnp.bfloat16).astype(jnp.float32)
    n = x.shape[0]
    src, dst = edge_index[0], edge_index[1]
    a = jnp.zeros((n, n), jnp.float32).at[dst, src].add(1.0)
    a = a + (1.0 + eps) * jnp.eye(n, dtype=jnp.float32)
    a = bf(a)
    h = bf(x.astype(jnp.float32))
    out = None
    for lp in params:
        z = jnp.dot(a, h, precision=hp)
        h1 = jnp.dot(bf(z), bf(lp["raw_w1"]), precision=hp) + lp["raw_b1"][None, :]
        if not lp["final"]:
            h1 = jnp.maximum(h1, 0.0)
        o = jnp.dot(bf(h1), bf(lp["raw_w2"]), precision=hp) + lp["raw_b2"][None, :]
        if not lp["final"]:
            o = jnp.maximum(o, 0.0)
        out = o
        h = bf(o)
    return out


if __name__ == "__main__":
    # GINEncoder(num_layers=3, in_channels=8, hid_channels=32, out_channels=16)
    num_nodes = 256
    num_layers = 3
    in_channels = 8
    hid_channels = 32
    out_channels = 16

    key = jax.random.PRNGKey(0)
    k_x, k_p = jax.random.split(key)

    x = jax.random.normal(k_x, (num_nodes, in_channels), jnp.float32)

    # deterministic bidirectional ring graph, edge_index shape [2, 2N]
    idx = jnp.arange(num_nodes)
    nxt = (idx + 1) % num_nodes
    edge_index = jnp.stack([jnp.concatenate([idx, nxt]),
                            jnp.concatenate([nxt, idx])], axis=0)

    params = init_gin_encoder_params(k_p, num_layers, in_channels,
                                     hid_channels, out_channels)

    # Adjacency hoisted out of the forward path: built once (padded, bf16) and
    # reusable across arbitrarily many forward calls.
    npad = _round_up(max(num_nodes, 128), 128)
    a_pad = build_gin_adjacency_padded(edge_index, num_nodes, npad)

    out = gin_encoder_forward(x, edge_index, params, a_pad=a_pad)
    jax.block_until_ready(out)

    ref = reference_forward(x, edge_index, params)
    assert out.shape == (num_nodes, out_channels)
    max_err = float(jnp.max(jnp.abs(out - ref)))
    assert jnp.allclose(out, ref, atol=2e-2, rtol=2e-2), max_err

    print("KERNEL_OK")
</pallas_src>

<mosaic_0001>
module attributes {stable_mosaic.version = 11 : i64} {
  func.func @_fused_gin_kernel(%arg0: memref<256x256xbf16, #tpu.memory_space<vmem>>, %arg1: memref<256x128xbf16, #tpu.memory_space<vmem>>, %arg2: memref<128x128xbf16, #tpu.memory_space<vmem>>, %arg3: memref<1x128xf32, #tpu.memory_space<vmem>>, %arg4: memref<128x128xbf16, #tpu.memory_space<vmem>>, %arg5: memref<1x128xf32, #tpu.memory_space<vmem>>, %arg6: memref<128x128xbf16, #tpu.memory_space<vmem>>, %arg7: memref<1x128xf32, #tpu.memory_space<vmem>>, %arg8: memref<128x128xbf16, #tpu.memory_space<vmem>>, %arg9: memref<1x128xf32, #tpu.memory_space<vmem>>, %arg10: memref<128x128xbf16, #tpu.memory_space<vmem>>, %arg11: memref<1x128xf32, #tpu.memory_space<vmem>>, %arg12: memref<128x128xbf16, #tpu.memory_space<vmem>>, %arg13: memref<1x128xf32, #tpu.memory_space<vmem>>, %arg14: memref<256x128xf32, #tpu.memory_space<vmem>>) attributes {dimension_semantics = [], scalar_prefetch = 0 : i64, scratch_operands = 0 : i64, tpu.core_type = #tpu.core_type<tc>} {
    %c0 = arith.constant 0 : index
    %c0_0 = arith.constant 0 : index
    %0 = vector.load %arg0[%c0, %c0_0] : memref<256x256xbf16, #tpu.memory_space<vmem>>, vector<256x256xbf16>
    %c0_1 = arith.constant 0 : index
    %c0_2 = arith.constant 0 : index
    %1 = vector.load %arg1[%c0_1, %c0_2] : memref<256x128xbf16, #tpu.memory_space<vmem>>, vector<256x128xbf16>
    %c0_3 = arith.constant 0 : index
    %c0_4 = arith.constant 0 : index
    %2 = vector.load %arg2[%c0_3, %c0_4] : memref<128x128xbf16, #tpu.memory_space<vmem>>, vector<128x128xbf16>
    %c0_5 = arith.constant 0 : index
    %c0_6 = arith.constant 0 : index
    %3 = vector.load %arg3[%c0_5, %c0_6] : memref<1x128xf32, #tpu.memory_space<vmem>>, vector<1x128xf32>
    %c0_7 = arith.constant 0 : index
    %c0_8 = arith.constant 0 : index
    %4 = vector.load %arg4[%c0_7, %c0_8] : memref<128x128xbf16, #tpu.memory_space<vmem>>, vector<128x128xbf16>
    %c0_9 = arith.constant 0 : index
    %c0_10 = arith.constant 0 : index
    %5 = vector.load %arg5[%c0_9, %c0_10] : memref<1x128xf32, #tpu.memory_space<vmem>>, vector<1x128xf32>
    %cst = arith.constant dense<0.000000e+00> : vector<256x128xf32>
    %6 = tpu.matmul %0, %1, %cst {dimension_numbers = #tpu.dot_dimension_numbers<[1], [0], [0], [1], [0, 0, 1, 1], [], []>} : vector<256x256xbf16>, vector<256x128xbf16>, vector<256x128xf32> -> vector<256x128xf32>
    %7 = arith.truncf %6 : vector<256x128xf32> to vector<256x128xbf16>
    %cst_11 = arith.constant dense<0.000000e+00> : vector<256x128xf32>
    %8 = tpu.matmul %7, %2, %cst_11 {dimension_numbers = #tpu.dot_dimension_numbers<[1], [0], [0], [1], [0, 0, 1, 1], [], []>} : vector<256x128xbf16>, vector<128x128xbf16>, vector<256x128xf32> -> vector<256x128xf32>
    %9 = vector.broadcast %3 : vector<1x128xf32> to vector<256x128xf32>
    %10 = arith.addf %8, %9 : vector<256x128xf32>
    %cst_12 = arith.constant 0.000000e+00 : f32
    %11 = vector.broadcast %cst_12 : f32 to vector<256x128xf32>
    %12 = arith.maximumf %10, %11 : vector<256x128xf32>
    %13 = arith.truncf %12 : vector<256x128xf32> to vector<256x128xbf16>
    %cst_13 = arith.constant dense<0.000000e+00> : vector<256x128xf32>
    %14 = tpu.matmul %13, %4, %cst_13 {dimension_numbers = #tpu.dot_dimension_numbers<[1], [0], [0], [1], [0, 0, 1, 1], [], []>} : vector<256x128xbf16>, vector<128x128xbf16>, vector<256x128xf32> -> vector<256x128xf32>
    %15 = vector.broadcast %5 : vector<1x128xf32> to vector<256x128xf32>
    %16 = arith.addf %14, %15 : vector<256x128xf32>
    %cst_14 = arith.constant 0.000000e+00 : f32
    %17 = vector.broadcast %cst_14 : f32 to vector<256x128xf32>
    %18 = arith.maximumf %16, %17 : vector<256x128xf32>
    %19 = arith.truncf %18 : vector<256x128xf32> to vector<256x128xbf16>
    %c0_15 = arith.constant 0 : index
    %c0_16 = arith.constant 0 : index
    %20 = vector.load %arg6[%c0_15, %c0_16] : memref<128x128xbf16, #tpu.memory_space<vmem>>, vector<128x128xbf16>
    %c0_17 = arith.constant 0 : index
    %c0_18 = arith.constant 0 : index
    %21 = vector.load %arg7[%c0_17, %c0_18] : memref<1x128xf32, #tpu.memory_space<vmem>>, vector<1x128xf32>
    %c0_19 = arith.constant 0 : index
    %c0_20 = arith.constant 0 : index
    %22 = vector.load %arg8[%c0_19, %c0_20] : memref<128x128xbf16, #tpu.memory_space<vmem>>, vector<128x128xbf16>
    %c0_21 = arith.constant 0 : index
    %c0_22 = arith.constant 0 : index
    %23 = vector.load %arg9[%c0_21, %c0_22] : memref<1x128xf32, #tpu.memory_space<vmem>>, vector<1x128xf32>
    %cst_23 = arith.constant dense<0.000000e+00> : vector<256x128xf32>
    %24 = tpu.matmul %0, %19, %cst_23 {dimension_numbers = #tpu.dot_dimension_numbers<[1], [0], [0], [1], [0, 0, 1, 1], [], []>} : vector<256x256xbf16>, vector<256x128xbf16>, vector<256x128xf32> -> vector<256x128xf32>
    %25 = arith.truncf %24 : vector<256x128xf32> to vector<256x128xbf16>
    %cst_24 = arith.constant dense<0.000000e+00> : vector<256x128xf32>
    %26 = tpu.matmul %25, %20, %cst_24 {dimension_numbers = #tpu.dot_dimension_numbers<[1], [0], [0], [1], [0, 0, 1, 1], [], []>} : vector<256x128xbf16>, vector<128x128xbf16>, vector<256x128xf32> -> vector<256x128xf32>
    %27 = vector.broadcast %21 : vector<1x128xf32> to vector<256x128xf32>
    %28 = arith.addf %26, %27 : vector<256x128xf32>
    %cst_25 = arith.constant 0.000000e+00 : f32
    %29 = vector.broadcast %cst_25 : f32 to vector<256x128xf32>
    %30 = arith.maximumf %28, %29 : vector<256x128xf32>
    %31 = arith.truncf %30 : vector<256x128xf32> to vector<256x128xbf16>
    %cst_26 = arith.constant dense<0.000000e+00> : vector<256x128xf32>
    %32 = tpu.matmul %31, %22, %cst_26 {dimension_numbers = #tpu.dot_dimension_numbers<[1], [0], [0], [1], [0, 0, 1, 1], [], []>} : vector<256x128xbf16>, vector<128x128xbf16>, vector<256x128xf32> -> vector<256x128xf32>
    %33 = vector.broadcast %23 : vector<1x128xf32> to vector<256x128xf32>
    %34 = arith.addf %32, %33 : vector<256x128xf32>
    %cst_27 = arith.constant 0.000000e+00 : f32
    %35 = vector.broadcast %cst_27 : f32 to vector<256x128xf32>
    %36 = arith.maximumf %34, %35 : vector<256x128xf32>
    %37 = arith.truncf %36 : vector<256x128xf32> to vector<256x128xbf16>
    %c0_28 = arith.constant 0 : index
    %c0_29 = arith.constant 0 : index
    %38 = vector.load %arg10[%c0_28, %c0_29] : memref<128x128xbf16, #tpu.memory_space<vmem>>, vector<128x128xbf16>
    %c0_30 = arith.constant 0 : index
    %c0_31 = arith.constant 0 : index
    %39 = vector.load %arg11[%c0_30, %c0_31] : memref<1x128xf32, #tpu.memory_space<vmem>>, vector<1x128xf32>
    %c0_32 = arith.constant 0 : index
    %c0_33 = arith.constant 0 : index
    %40 = vector.load %arg12[%c0_32, %c0_33] : memref<128x128xbf16, #tpu.memory_space<vmem>>, vector<128x128xbf16>
    %c0_34 = arith.constant 0 : index
    %c0_35 = arith.constant 0 : index
    %41 = vector.load %arg13[%c0_34, %c0_35] : memref<1x128xf32, #tpu.memory_space<vmem>>, vector<1x128xf32>
    %cst_36 = arith.constant dense<0.000000e+00> : vector<256x128xf32>
    %42 = tpu.matmul %0, %37, %cst_36 {dimension_numbers = #tpu.dot_dimension_numbers<[1], [0], [0], [1], [0, 0, 1, 1], [], []>} : vector<256x256xbf16>, vector<256x128xbf16>, vector<256x128xf32> -> vector<256x128xf32>
    %43 = arith.truncf %42 : vector<256x128xf32> to vector<256x128xbf16>
    %cst_37 = arith.constant dense<0.000000e+00> : vector<256x128xf32>
    %44 = tpu.matmul %43, %38, %cst_37 {dimension_numbers = #tpu.dot_dimension_numbers<[1], [0], [0], [1], [0, 0, 1, 1], [], []>} : vector<256x128xbf16>, vector<128x128xbf16>, vector<256x128xf32> -> vector<256x128xf32>
    %45 = vector.broadcast %39 : vector<1x128xf32> to vector<256x128xf32>
    %46 = arith.addf %44, %45 : vector<256x128xf32>
    %47 = arith.truncf %46 : vector<256x128xf32> to vector<256x128xbf16>
    %cst_38 = arith.constant dense<0.000000e+00> : vector<256x128xf32>
    %48 = tpu.matmul %47, %40, %cst_38 {dimension_numbers = #tpu.dot_dimension_numbers<[1], [0], [0], [1], [0, 0, 1, 1], [], []>} : vector<256x128xbf16>, vector<128x128xbf16>, vector<256x128xf32> -> vector<256x128xf32>
    %49 = vector.broadcast %41 : vector<1x128xf32> to vector<256x128xf32>
    %50 = arith.addf %48, %49 : vector<256x128xf32>
    %c0_39 = arith.constant 0 : index
    %c0_40 = arith.constant 0 : index
    %51 = vector.load %arg14[%c0_39, %c0_40] : memref<256x128xf32, #tpu.memory_space<vmem>>, vector<256x128xf32>
    tpu.vector_store %arg14[%c0_39, %c0_40], %50 {strides = array<i32>} : memref<256x128xf32, #tpu.memory_space<vmem>>, vector<256x128xf32>,
    return
  }
}

</mosaic_0001>

<llo_original>
// kernel: tpu_custom_call.1
$region0: #{tpu_custom_call.1}
  #allocation0 [shape = 'u32[]', space=smem, size = 0x4, offset = 0x4, fixed_abs, tag = 'smem constant byte address 0x4 - core index']
  #allocation1 [shape = 'u32[144,128]{1,0:T(1,128)}', space=vmem, size = 0x12000, scoped, tag = 'internal scratch']
  %s0 = inlined_call_operand.hbm [shape: bf16[256,256], index: 0, kind: input, shape index: {}]
  %s1 = inlined_call_operand.hbm [shape: bf16[256,128], index: 1, kind: input, shape index: {}]
  %s2 = inlined_call_operand.hbm [shape: bf16[128,128], index: 2, kind: input, shape index: {}]
  %s3 = inlined_call_operand.vmem [shape: f32[1,128], index: 3, kind: input, shape index: {}]
  %s4 = inlined_call_operand.hbm [shape: bf16[128,128], index: 4, kind: input, shape index: {}]
  %s5 = inlined_call_operand.vmem [shape: f32[1,128], index: 5, kind: input, shape index: {}]
  %s6 = inlined_call_operand.hbm [shape: bf16[128,128], index: 6, kind: input, shape index: {}]
  %s7 = inlined_call_operand.vmem [shape: f32[1,128], index: 7, kind: input, shape index: {}]
  %s8 = inlined_call_operand.hbm [shape: bf16[128,128], index: 8, kind: input, shape index: {}]
  %s9 = inlined_call_operand.vmem [shape: f32[1,128], index: 9, kind: input, shape index: {}]
  %s10 = inlined_call_operand.hbm [shape: bf16[128,128], index: 10, kind: input, shape index: {}]
  %s11 = inlined_call_operand.vmem [shape: f32[1,128], index: 11, kind: input, shape index: {}]
  %s12 = inlined_call_operand.hbm [shape: bf16[128,128], index: 12, kind: input, shape index: {}]
  %s13 = inlined_call_operand.vmem [shape: f32[1,128], index: 13, kind: input, shape index: {}]
  %s14 = inlined_call_operand.hbm [shape: f32[256,128], index: 14, kind: output, shape index: {}]
  %s15 = sld [smem:[#allocation0]]
  $region98: #{tpu_custom_call.1} parent=0
    _
  %s17 = ssub.s32 1, %s15
  %s18 = scalar_select 0, %s17, %s15
  $region1: #{tpu_custom_call.1} parent=0
    #allocation2 [shape = 'u8[131072]{0}', space=vmem, size = 0x20000, scoped, tag = 'input window, operand 0, single buffered']
    #allocation3 [shape = 's32[1]{0}', space=sflag, size = 0x4, scoped, tag = 'scoped memory for tpu_custom_call.1']
    #allocation4 [shape = 's32[1]{0}', space=sflag, size = 0x4, scoped, tag = 'scoped memory for tpu_custom_call.1']
    #allocation5 [shape = 'u8[65536]{0}', space=vmem, size = 0x10000, scoped, tag = 'input window, operand 1, single buffered']
    #allocation6 [shape = 's32[1]{0}', space=sflag, size = 0x4, scoped, tag = 'scoped memory for tpu_custom_call.1']
    #allocation7 [shape = 'u8[32768]{0}', space=vmem, size = 0x8000, scoped, tag = 'input window, operand 2, single buffered']
    #allocation8 [shape = 'u8[32768]{0}', space=vmem, size = 0x8000, scoped, tag = 'input window, operand 4, single buffered']
    #allocation9 [shape = 's32[1]{0}', space=sflag, size = 0x4, scoped, tag = 'scoped memory for tpu_custom_call.1']
    #allocation10 [shape = 'u8[32768]{0}', space=vmem, size = 0x8000, scoped, tag = 'input window, operand 6, single buffered']
    #allocation11 [shape = 'u8[32768]{0}', space=vmem, size = 0x8000, scoped, tag = 'input window, operand 8, single buffered']
    #allocation12 [shape = 's32[1]{0}', space=sflag, size = 0x4, scoped, tag = 'scoped memory for tpu_custom_call.1']
    #allocation13 [shape = 'u8[32768]{0}', space=vmem, size = 0x8000, scoped, tag = 'input window, operand 10, single buffered']
    #allocation14 [shape = 'u8[32768]{0}', space=vmem, size = 0x8000, scoped, tag = 'input window, operand 12, single buffered']
    #allocation15 [shape = 's32[1]{0}', space=sflag, size = 0x4, scoped, tag = 'scoped memory for tpu_custom_call.1']
    #allocation16 [shape = 'u8[131072]{0}', space=vmem, size = 0x20000, scoped, tag = 'output window, operand 0, single buffered']
    %19 = vsyncpa [#allocation3], 0
    %20 = vsyncpa [#allocation6], 0
    %21 = vsyncpa [#allocation9], 0
    %22 = vsyncpa [#allocation12], 0
    %23 = vsyncpa [#allocation15], 0
    %24 = vsyncpa [#allocation4], 0
    // Predicated region
    $region2: #{tpu_custom_call.1} parent=1 // pred_check
      _
    $region3: #{tpu_custom_call.1} parent=1 // pred_check_branch
      %26 = sbr.rel (0) target = $region5
    $region4: #{tpu_custom_call.1} parent=1 // pred_region
      %s28 = ssub.s32 4096, 4096
      %29 = vsyncadd [#allocation3], %s28
      %s30 = sshll.u32 [#allocation2], 4
      %s31 = int_to_ptr.vmem [resolvable:$true] %s30
      %36 = dma.hbm_to_vmem [thread:$0]  %s0, 4096, %s31, [#allocation3], 128, 128, 8
    $region5: #{tpu_custom_call.1} parent=1 // pred_fallthru
      _
    // Predicated region
    $region6: #{tpu_custom_call.1} parent=1 // pred_check
      _
    $region7: #{tpu_custom_call.1} parent=1 // pred_check_branch
      %38 = sbr.rel (0) target = $region9
    $region8: #{tpu_custom_call.1} parent=1 // pred_region
      %s40 = ssub.s32 2048, 2048
      %41 = vsyncadd [#allocation6], %s40
      %s42 = sshll.u32 [#allocation5], 4
      %s43 = int_to_ptr.vmem [resolvable:$true] %s42
      %48 = dma.hbm_to_vmem [thread:$0]  %s1, 2048, %s43, [#allocation6], 64, 64, 4
    $region9: #{tpu_custom_call.1} parent=1 // pred_fallthru
      _
    // Predicated region
    $region10: #{tpu_custom_call.1} parent=1 // pred_check
      _
    $region11: #{tpu_custom_call.1} parent=1 // pred_check_branch
      %50 = sbr.rel (0) target = $region13
    $region12: #{tpu_custom_call.1} parent=1 // pred_region
      %s52 = ssub.s32 1024, 1024
      %53 = vsyncadd [#allocation6], %s52
      %s54 = sshll.u32 [#allocation7], 4
      %s55 = int_to_ptr.vmem [resolvable:$true] %s54
      %60 = dma.hbm_to_vmem [thread:$0]  %s2, 1024, %s55, [#allocation6], 64, 64, 4
    $region13: #{tpu_custom_call.1} parent=1 // pred_fallthru
      _
    // Predicated region
    $region14: #{tpu_custom_call.1} parent=1 // pred_check
      _
    $region15: #{tpu_custom_call.1} parent=1 // pred_check_branch
      %62 = sbr.rel (0) target = $region17
    $region16: #{tpu_custom_call.1} parent=1 // pred_region
      _
    $region17: #{tpu_custom_call.1} parent=1 // pred_fallthru
      _
    // Predicated region
    $region18: #{tpu_custom_call.1} parent=1 // pred_check
      _
    $region19: #{tpu_custom_call.1} parent=1 // pred_check_branch
      %64 = sbr.rel (0) target = $region21
    $region20: #{tpu_custom_call.1} parent=1 // pred_region
      %s66 = ssub.s32 1024, 1024
      %67 = vsyncadd [#allocation9], %s66
      %s68 = sshll.u32 [#allocation8], 4
      %s69 = int_to_ptr.vmem [resolvable:$true] %s68
      %74 = dma.hbm_to_vmem [thread:$0]  %s4, 1024, %s69, [#allocation9], 64, 64, 4
    $region21: #{tpu_custom_call.1} parent=1 // pred_fallthru
      _
    // Predicated region
    $region22: #{tpu_custom_call.1} parent=1 // pred_check
      _
    $region23: #{tpu_custom_call.1} parent=1 // pred_check_branch
      %76 = sbr.rel (0) target = $region25
    $region24: #{tpu_custom_call.1} parent=1 // pred_region
      _
    $region25: #{tpu_custom_call.1} parent=1 // pred_fallthru
      _
    // Predicated region
    $region26: #{tpu_custom_call.1} parent=1 // pred_check
      _
    $region27: #{tpu_custom_call.1} parent=1 // pred_check_branch
      %78 = sbr.rel (0) target = $region29
    $region28: #{tpu_custom_call.1} parent=1 // pred_region
      %s80 = ssub.s32 1024, 1024
      %81 = vsyncadd [#allocation9], %s80
      %s82 = sshll.u32 [#allocation10], 4
      %s83 = int_to_ptr.vmem [resolvable:$true] %s82
      %88 = dma.hbm_to_vmem [thread:$0]  %s6, 1024, %s83, [#allocation9], 64, 64, 4
    $region29: #{tpu_custom_call.1} parent=1 // pred_fallthru
      _
    // Predicated region
    $region30: #{tpu_custom_call.1} parent=1 // pred_check
      _
    $region31: #{tpu_custom_call.1} parent=1 // pred_check_branch
      %90 = sbr.rel (0) target = $region33
    $region32: #{tpu_custom_call.1} parent=1 // pred_region
      _
    $region33: #{tpu_custom_call.1} parent=1 // pred_fallthru
      _
    // Predicated region
    $region34: #{tpu_custom_call.1} parent=1 // pred_check
      _
    $region35: #{tpu_custom_call.1} parent=1 // pred_check_branch
      %92 = sbr.rel (0) target = $region37
    $region36: #{tpu_custom_call.1} parent=1 // pred_region
      %s94 = ssub.s32 1024, 1024
      %95 = vsyncadd [#allocation12], %s94
      %s96 = sshll.u32 [#allocation11], 4
      %s97 = int_to_ptr.vmem [resolvable:$true] %s96
      %102 = dma.hbm_to_vmem [thread:$0]  %s8, 1024, %s97, [#allocation12], 64, 64, 4
    $region37: #{tpu_custom_call.1} parent=1 // pred_fallthru
      _
    // Predicated region
    $region38: #{tpu_custom_call.1} parent=1 // pred_check
      _
    $region39: #{tpu_custom_call.1} parent=1 // pred_check_branch
      %104 = sbr.rel (0) target = $region41
    $region40: #{tpu_custom_call.1} parent=1 // pred_region
      _
    $region41: #{tpu_custom_call.1} parent=1 // pred_fallthru
      _
    // Predicated region
    $region42: #{tpu_custom_call.1} parent=1 // pred_check
      _
    $region43: #{tpu_custom_call.1} parent=1 // pred_check_branch
      %106 = sbr.rel (0) target = $region45
    $region44: #{tpu_custom_call.1} parent=1 // pred_region
      %s108 = ssub.s32 1024, 1024
      %109 = vsyncadd [#allocation12], %s108
      %s110 = sshll.u32 [#allocation13], 4
      %s111 = int_to_ptr.vmem [resolvable:$true] %s110
      %116 = dma.hbm_to_vmem [thread:$0]  %s10, 1024, %s111, [#allocation12], 64, 64, 4
    $region45: #{tpu_custom_call.1} parent=1 // pred_fallthru
      _
    // Predicated region
    $region46: #{tpu_custom_call.1} parent=1 // pred_check
      _
    $region47: #{tpu_custom_call.1} parent=1 // pred_check_branch
      %118 = sbr.rel (0) target = $region49
    $region48: #{tpu_custom_call.1} parent=1 // pred_region
      _
    $region49: #{tpu_custom_call.1} parent=1 // pred_fallthru
      _
    // Predicated region
    $region50: #{tpu_custom_call.1} parent=1 // pred_check
      _
    $region51: #{tpu_custom_call.1} parent=1 // pred_check_branch
      %120 = sbr.rel (0) target = $region53
    $region52: #{tpu_custom_call.1} parent=1 // pred_region
      %s122 = ssub.s32 1024, 1024
      %123 = vsyncadd [#allocation15], %s122
      %s124 = sshll.u32 [#allocation14], 4
      %s125 = int_to_ptr.vmem [resolvable:$true] %s124
      %130 = dma.hbm_to_vmem [thread:$0]  %s12, 1024, %s125, [#allocation15], 64, 64, 4
    $region53: #{tpu_custom_call.1} parent=1 // pred_fallthru
      _
    // Predicated region
    $region54: #{tpu_custom_call.1} parent=1 // pred_check
      _
    $region55: #{tpu_custom_call.1} parent=1 // pred_check_branch
      %132 = sbr.rel (0) target = $region57
    $region56: #{tpu_custom_call.1} parent=1 // pred_region
      _
    $region57: #{tpu_custom_call.1} parent=1 // pred_fallthru
      _
    // Predicated region
    $region58: #{tpu_custom_call.1} parent=1 // pred_check
      _
    $region59: #{tpu_custom_call.1} parent=1 // pred_check_branch
      %134 = sbr.rel (0) target = $region61
    $region60: #{tpu_custom_call.1} parent=1 // pred_region
      %135 = dma.done [#allocation3], 4096
    $region61: #{tpu_custom_call.1} parent=1 // pred_fallthru
      _
    // Predicated region
    $region62: #{tpu_custom_call.1} parent=1 // pred_check
      _
    $region63: #{tpu_custom_call.1} parent=1 // pred_check_branch
      %137 = sbr.rel (0) target = $region65
    $region64: #{tpu_custom_call.1} parent=1 // pred_region
      %138 = dma.done [#allocation6], 2048
    $region65: #{tpu_custom_call.1} parent=1 // pred_fallthru
      _
    // Predicated region
    $region66: #{tpu_custom_call.1} parent=1 // pred_check
      _
    $region67: #{tpu_custom_call.1} parent=1 // pred_check_branch
      %140 = sbr.rel (0) target = $region69
    $region68: #{tpu_custom_call.1} parent=1 // pred_region
      %141 = dma.done [#allocation6], 1024
    $region69: #{tpu_custom_call.1} parent=1 // pred_fallthru
      _
    // Predicated region
    $region70: #{tpu_custom_call.1} parent=1 // pred_check
      _
    $region71: #{tpu_custom_call.1} parent=1 // pred_check_branch
      %143 = sbr.rel (0) target = $region73
    $region72: #{tpu_custom_call.1} parent=1 // pred_region
      %144 = dma.done [#allocation9], 1024
    $region73: #{tpu_custom_call.1} parent=1 // pred_fallthru
      _
    // Predicated region
    $region74: #{tpu_custom_call.1} parent=1 // pred_check
      _
    $region75: #{tpu_custom_call.1} parent=1 // pred_check_branch
      %146 = sbr.rel (0) target = $region77
    $region76: #{tpu_custom_call.1} parent=1 // pred_region
      %147 = dma.done [#allocation9], 1024
    $region77: #{tpu_custom_call.1} parent=1 // pred_fallthru
      _
    // Predicated region
    $region78: #{tpu_custom_call.1} parent=1 // pred_check
      _
    $region79: #{tpu_custom_call.1} parent=1 // pred_check_branch
      %149 = sbr.rel (0) target = $region81
    $region80: #{tpu_custom_call.1} parent=1 // pred_region
      %150 = dma.done [#allocation12], 1024
    $region81: #{tpu_custom_call.1} parent=1 // pred_fallthru
      _
    // Predicated region
    $region82: #{tpu_custom_call.1} parent=1 // pred_check
      _
    $region83: #{tpu_custom_call.1} parent=1 // pred_check_branch
      %152 = sbr.rel (0) target = $region85
    $region84: #{tpu_custom_call.1} parent=1 // pred_region
      %153 = dma.done [#allocation12], 1024
    $region85: #{tpu_custom_call.1} parent=1 // pred_fallthru
      _
    // Predicated region
    $region86: #{tpu_custom_call.1} parent=1 // pred_check
      _
    $region87: #{tpu_custom_call.1} parent=1 // pred_check_branch
      %155 = sbr.rel (0) target = $region89
    $region88: #{tpu_custom_call.1} parent=1 // pred_region
      %156 = dma.done [#allocation15], 1024
    $region89: #{tpu_custom_call.1} parent=1 // pred_fallthru
      _
    %v158 = vld [vmem:[#allocation2] sm:$0xff]
    %v159 = vld [vmem:[#allocation2 + $0x8] sm:$0xff]
    %v160 = vld [vmem:[#allocation2 + $0x10] sm:$0xff]
    %v161 = vld [vmem:[#allocation2 + $0x18] sm:$0xff]
    %v162 = vld [vmem:[#allocation2 + $0x20] sm:$0xff]
    %v163 = vld [vmem:[#allocation2 + $0x28] sm:$0xff]
    %v164 = vld [vmem:[#allocation2 + $0x30] sm:$0xff]
    %v165 = vld [vmem:[#allocation2 + $0x38] sm:$0xff]
    %v166 = vld [vmem:[#allocation2 + $0x40] sm:$0xff]
    %v167 = vld [vmem:[#allocation2 + $0x48] sm:$0xff]
    %v168 = vld [vmem:[#allocation2 + $0x50] sm:$0xff]
    %v169 = vld [vmem:[#allocation2 + $0x58] sm:$0xff]
    %v170 = vld [vmem:[#allocation2 + $0x60] sm:$0xff]
    %v171 = vld [vmem:[#allocation2 + $0x68] sm:$0xff]
    %v172 = vld [vmem:[#allocation2 + $0x70] sm:$0xff]
    %v173 = vld [vmem:[#allocation2 + $0x78] sm:$0xff]
    %v174 = vld [vmem:[#allocation2 + $0x80] sm:$0xff]
    %v175 = vld [vmem:[#allocation2 + $0x88] sm:$0xff]
    %v176 = vld [vmem:[#allocation2 + $0x90] sm:$0xff]
    %v177 = vld [vmem:[#allocation2 + $0x98] sm:$0xff]
    %v178 = vld [vmem:[#allocation2 + $0xa0] sm:$0xff]
    %v179 = vld [vmem:[#allocation2 + $0xa8] sm:$0xff]
    %v180 = vld [vmem:[#allocation2 + $0xb0] sm:$0xff]
    %v181 = vld [vmem:[#allocation2 + $0xb8] sm:$0xff]
    %v182 = vld [vmem:[#allocation2 + $0xc0] sm:$0xff]
    %v183 = vld [vmem:[#allocation2 + $0xc8] sm:$0xff]
    %v184 = vld [vmem:[#allocation2 + $0xd0] sm:$0xff]
    %v185 = vld [vmem:[#allocation2 + $0xd8] sm:$0xff]
    %v186 = vld [vmem:[#allocation2 + $0xe0] sm:$0xff]
    %v187 = vld [vmem:[#allocation2 + $0xe8] sm:$0xff]
    %v188 = vld [vmem:[#allocation2 + $0xf0] sm:$0xff]
    %v189 = vld [vmem:[#allocation2 + $0xf8] sm:$0xff]
    %v190 = vld [vmem:[#allocation5] sm:$0xf]
    %v191 = vld [vmem:[#allocation5 + $0x4] sm:$0xf]
    %v192 = vld [vmem:[#allocation5 + $0x8] sm:$0xf]
    %v193 = vld [vmem:[#allocation5 + $0xc] sm:$0xf]
    %v194 = vld [vmem:[#allocation5 + $0x10] sm:$0xf]
    %v195 = vld [vmem:[#allocation5 + $0x14] sm:$0xf]
    %v196 = vld [vmem:[#allocation5 + $0x18] sm:$0xf]
    %v197 = vld [vmem:[#allocation5 + $0x1c] sm:$0xf]
    %v198 = vld [vmem:[#allocation5 + $0x20] sm:$0xf]
    %v199 = vld [vmem:[#allocation5 + $0x24] sm:$0xf]
    %v200 = vld [vmem:[#allocation5 + $0x28] sm:$0xf]
    %v201 = vld [vmem:[#allocation5 + $0x2c] sm:$0xf]
    %v202 = vld [vmem:[#allocation5 + $0x30] sm:$0xf]
    %v203 = vld [vmem:[#allocation5 + $0x34] sm:$0xf]
    %v204 = vld [vmem:[#allocation5 + $0x38] sm:$0xf]
    %v205 = vld [vmem:[#allocation5 + $0x3c] sm:$0xf]
    %v206 = vld [vmem:[#allocation5 + $0x40] sm:$0xf]
    %v207 = vld [vmem:[#allocation5 + $0x44] sm:$0xf]
    %v208 = vld [vmem:[#allocation5 + $0x48] sm:$0xf]
    %v209 = vld [vmem:[#allocation5 + $0x4c] sm:$0xf]
    %v210 = vld [vmem:[#allocation5 + $0x50] sm:$0xf]
    %v211 = vld [vmem:[#allocation5 + $0x54] sm:$0xf]
    %v212 = vld [vmem:[#allocation5 + $0x58] sm:$0xf]
    %v213 = vld [vmem:[#allocation5 + $0x5c] sm:$0xf]
    %v214 = vld [vmem:[#allocation5 + $0x60] sm:$0xf]
    %v215 = vld [vmem:[#allocation5 + $0x64] sm:$0xf]
    %v216 = vld [vmem:[#allocation5 + $0x68] sm:$0xf]
    %v217 = vld [vmem:[#allocation5 + $0x6c] sm:$0xf]
    %v218 = vld [vmem:[#allocation5 + $0x70] sm:$0xf]
    %v219 = vld [vmem:[#allocation5 + $0x74] sm:$0xf]
    %v220 = vld [vmem:[#allocation5 + $0x78] sm:$0xf]
    %v221 = vld [vmem:[#allocation5 + $0x7c] sm:$0xf]
    %v222 = vld [vmem:[#allocation7] sm:$0xf]
    %v223 = vld [vmem:[#allocation7 + $0x4] sm:$0xf]
    %v224 = vld [vmem:[#allocation7 + $0x8] sm:$0xf]
    %v225 = vld [vmem:[#allocation7 + $0xc] sm:$0xf]
    %v226 = vld [vmem:[#allocation7 + $0x10] sm:$0xf]
    %v227 = vld [vmem:[#allocation7 + $0x14] sm:$0xf]
    %v228 = vld [vmem:[#allocation7 + $0x18] sm:$0xf]
    %v229 = vld [vmem:[#allocation7 + $0x1c] sm:$0xf]
    %v230 = vld [vmem:[#allocation7 + $0x20] sm:$0xf]
    %v231 = vld [vmem:[#allocation7 + $0x24] sm:$0xf]
    %v232 = vld [vmem:[#allocation7 + $0x28] sm:$0xf]
    %v233 = vld [vmem:[#allocation7 + $0x2c] sm:$0xf]
    %v234 = vld [vmem:[#allocation7 + $0x30] sm:$0xf]
    %v235 = vld [vmem:[#allocation7 + $0x34] sm:$0xf]
    %v236 = vld [vmem:[#allocation7 + $0x38] sm:$0xf]
    %v237 = vld [vmem:[#allocation7 + $0x3c] sm:$0xf]
    %v238 = vld [vmem:[%s3] sm:$0x1]
    %v239 = vld [vmem:[#allocation8] sm:$0xf]
    %v240 = vld [vmem:[#allocation8 + $0x4] sm:$0xf]
    %v241 = vld [vmem:[#allocation8 + $0x8] sm:$0xf]
    %v242 = vld [vmem:[#allocation8 + $0xc] sm:$0xf]
    %v243 = vld [vmem:[#allocation8 + $0x10] sm:$0xf]
    %v244 = vld [vmem:[#allocation8 + $0x14] sm:$0xf]
    %v245 = vld [vmem:[#allocation8 + $0x18] sm:$0xf]
    %v246 = vld [vmem:[#allocation8 + $0x1c] sm:$0xf]
    %v247 = vld [vmem:[#allocation8 + $0x20] sm:$0xf]
    %v248 = vld [vmem:[#allocation8 + $0x24] sm:$0xf]
    %v249 = vld [vmem:[#allocation8 + $0x28] sm:$0xf]
    %v250 = vld [vmem:[#allocation8 + $0x2c] sm:$0xf]
    %v251 = vld [vmem:[#allocation8 + $0x30] sm:$0xf]
    %v252 = vld [vmem:[#allocation8 + $0x34] sm:$0xf]
    %v253 = vld [vmem:[#allocation8 + $0x38] sm:$0xf]
    %v254 = vld [vmem:[#allocation8 + $0x3c] sm:$0xf]
    %v255 = vld [vmem:[%s5] sm:$0x1]
    %v288 = vunpack.c.l.b16 %v158
    %v289 = vunpack.c.h.b16 %v158
    %v290 = vunpack.c.l.b16 %v159
    %v291 = vunpack.c.h.b16 %v159
    %v292 = vunpack.c.l.b16 %v160
    %v293 = vunpack.c.h.b16 %v160
    %v294 = vunpack.c.l.b16 %v161
    %v295 = vunpack.c.h.b16 %v161
    %v296 = vunpack.c.l.b16 %v162
    %v297 = vunpack.c.h.b16 %v162
    %v298 = vunpack.c.l.b16 %v163
    %v299 = vunpack.c.h.b16 %v163
    %v300 = vunpack.c.l.b16 %v164
    %v301 = vunpack.c.h.b16 %v164
    %v302 = vunpack.c.l.b16 %v165
    %v303 = vunpack.c.h.b16 %v165
    %v304 = vunpack.c.l.b16 %v166
    %v305 = vunpack.c.h.b16 %v166
    %v306 = vunpack.c.l.b16 %v167
    %v307 = vunpack.c.h.b16 %v167
    %v308 = vunpack.c.l.b16 %v168
    %v309 = vunpack.c.h.b16 %v168
    %v310 = vunpack.c.l.b16 %v169
    %v311 = vunpack.c.h.b16 %v169
    %v312 = vunpack.c.l.b16 %v170
    %v313 = vunpack.c.h.b16 %v170
    %v314 = vunpack.c.l.b16 %v171
    %v315 = vunpack.c.h.b16 %v171
    %v316 = vunpack.c.l.b16 %v172
    %v317 = vunpack.c.h.b16 %v172
    %v318 = vunpack.c.l.b16 %v173
    %v319 = vunpack.c.h.b16 %v173
    %v320 = vunpack.c.l.b16 %v174
    %v321 = vunpack.c.h.b16 %v174
    %v322 = vunpack.c.l.b16 %v175
    %v323 = vunpack.c.h.b16 %v175
    %v324 = vunpack.c.l.b16 %v176
    %v325 = vunpack.c.h.b16 %v176
    %v326 = vunpack.c.l.b16 %v177
    %v327 = vunpack.c.h.b16 %v177
    %v328 = vunpack.c.l.b16 %v178
    %v329 = vunpack.c.h.b16 %v178
    %v330 = vunpack.c.l.b16 %v179
    %v331 = vunpack.c.h.b16 %v179
    %v332 = vunpack.c.l.b16 %v180
    %v333 = vunpack.c.h.b16 %v180
    %v334 = vunpack.c.l.b16 %v181
    %v335 = vunpack.c.h.b16 %v181
    %v336 = vunpack.c.l.b16 %v182
    %v337 = vunpack.c.h.b16 %v182
    %v338 = vunpack.c.l.b16 %v183
    %v339 = vunpack.c.h.b16 %v183
    %v340 = vunpack.c.l.b16 %v184
    %v341 = vunpack.c.h.b16 %v184
    %v342 = vunpack.c.l.b16 %v185
    %v343 = vunpack.c.h.b16 %v185
    %v344 = vunpack.c.l.b16 %v186
    %v345 = vunpack.c.h.b16 %v186
    %v346 = vunpack.c.l.b16 %v187
    %v347 = vunpack.c.h.b16 %v187
    %v348 = vunpack.c.l.b16 %v188
    %v349 = vunpack.c.h.b16 %v188
    %v350 = vunpack.c.l.b16 %v189
    %v351 = vunpack.c.h.b16 %v189
    %v352 = vpack.c.b16 %v290, %v288
    %v353 = vpack.c.b16 %v291, %v289
    %v354 = vpack.c.b16 %v294, %v292
    %v355 = vpack.c.b16 %v295, %v293
    %v356 = vpack.c.b16 %v298, %v296
    %v357 = vpack.c.b16 %v299, %v297
    %v358 = vpack.c.b16 %v302, %v300
    %v359 = vpack.c.b16 %v303, %v301
    %v360 = vpack.c.b16 %v306, %v304
    %v361 = vpack.c.b16 %v307, %v305
    %v362 = vpack.c.b16 %v310, %v308
    %v363 = vpack.c.b16 %v311, %v309
    %v364 = vpack.c.b16 %v314, %v312
    %v365 = vpack.c.b16 %v315, %v313
    %v366 = vpack.c.b16 %v318, %v316
    %v367 = vpack.c.b16 %v319, %v317
    %v368 = vpack.c.b16 %v322, %v320
    %v369 = vpack.c.b16 %v323, %v321
    %v370 = vpack.c.b16 %v326, %v324
    %v371 = vpack.c.b16 %v327, %v325
    %v372 = vpack.c.b16 %v330, %v328
    %v373 = vpack.c.b16 %v331, %v329
    %v374 = vpack.c.b16 %v334, %v332
    %v375 = vpack.c.b16 %v335, %v333
    %v376 = vpack.c.b16 %v338, %v336
    %v377 = vpack.c.b16 %v339, %v337
    %v378 = vpack.c.b16 %v342, %v340
    %v379 = vpack.c.b16 %v343, %v341
    %v380 = vpack.c.b16 %v346, %v344
    %v381 = vpack.c.b16 %v347, %v345
    %v382 = vpack.c.b16 %v350, %v348
    %v383 = vpack.c.b16 %v351, %v349
    %v448 = vunpack.c.l.b16 %v190
    %v449 = vunpack.c.l.b16 %v191
    %v450 = vunpack.c.l.b16 %v192
    %v451 = vunpack.c.l.b16 %v193
    %v452 = vunpack.c.l.b16 %v194
    %v453 = vunpack.c.l.b16 %v195
    %v454 = vunpack.c.l.b16 %v196
    %v455 = vunpack.c.l.b16 %v197
    %v456 = vunpack.c.l.b16 %v198
    %v457 = vunpack.c.l.b16 %v199
    %v458 = vunpack.c.l.b16 %v200
    %v459 = vunpack.c.l.b16 %v201
    %v460 = vunpack.c.l.b16 %v202
    %v461 = vunpack.c.l.b16 %v203
    %v462 = vunpack.c.l.b16 %v204
    %v463 = vunpack.c.l.b16 %v205
    %v464 = vunpack.c.l.b16 %v206
    %v465 = vunpack.c.l.b16 %v207
    %v466 = vunpack.c.l.b16 %v208
    %v467 = vunpack.c.l.b16 %v209
    %v468 = vunpack.c.l.b16 %v210
    %v469 = vunpack.c.l.b16 %v211
    %v470 = vunpack.c.l.b16 %v212
    %v471 = vunpack.c.l.b16 %v213
    %v472 = vunpack.c.l.b16 %v214
    %v473 = vunpack.c.l.b16 %v215
    %v474 = vunpack.c.l.b16 %v216
    %v475 = vunpack.c.l.b16 %v217
    %v476 = vunpack.c.l.b16 %v218
    %v477 = vunpack.c.l.b16 %v219
    %v478 = vunpack.c.l.b16 %v220
    %v479 = vunpack.c.l.b16 %v221
    %v480 = vpack.c.b16 %v449, %v448
    %v481 = vpack.c.b16 %v451, %v450
    %v482 = vpack.c.b16 %v453, %v452
    %v483 = vpack.c.b16 %v455, %v454
    %v484 = vpack.c.b16 %v457, %v456
    %v485 = vpack.c.b16 %v459, %v458
    %v486 = vpack.c.b16 %v461, %v460
    %v487 = vpack.c.b16 %v463, %v462
    %v488 = vpack.c.b16 %v465, %v464
    %v489 = vpack.c.b16 %v467, %v466
    %v490 = vpack.c.b16 %v469, %v468
    %v491 = vpack.c.b16 %v471, %v470
    %v492 = vpack.c.b16 %v473, %v472
    %v493 = vpack.c.b16 %v475, %v474
    %v494 = vpack.c.b16 %v477, %v476
    %v495 = vpack.c.b16 %v479, %v478
    %512 = vmatprep.subr.bf16.mxu0 0
    %513 = vmatpush1.bf16.msra.mxu0 %v480
    %514 = vmatprep.subr.bf16.mxu0 0
    %515 = vmatpush1.bf16.msra.mxu0 %v481
    %516 = vmatprep.subr.bf16.mxu0 0
    %517 = vmatpush1.bf16.msra.mxu0 %v482
    %518 = vmatprep.subr.bf16.mxu0 0
    %519 = vmatpush1.bf16.msra.mxu0 %v483
    %520 = vmatprep.subr.bf16.mxu0 0
    %521 = vmatpush1.bf16.msra.mxu0 %v484
    %522 = vmatprep.subr.bf16.mxu0 0
    %523 = vmatpush1.bf16.msra.mxu0 %v485
    %524 = vmatprep.subr.bf16.mxu0 0
    %525 = vmatpush1.bf16.msra.mxu0 %v486
    %526 = vmatprep.subr.bf16.mxu0 0
    %527 = vmatpush1.bf16.msra.mxu0 %v487
    %528 = vmatprep.subr.bf16.mxu0 0
    %529 = vmatpush1.bf16.msra.mxu0 %v488
    %530 = vmatprep.subr.bf16.mxu0 0
    %531 = vmatpush1.bf16.msra.mxu0 %v489
    %532 = vmatprep.subr.bf16.mxu0 0
    %533 = vmatpush1.bf16.msra.mxu0 %v490
    %534 = vmatprep.subr.bf16.mxu0 0
    %535 = vmatpush1.bf16.msra.mxu0 %v491
    %536 = vmatprep.subr.bf16.mxu0 0
    %537 = vmatpush1.bf16.msra.mxu0 %v492
    %538 = vmatprep.subr.bf16.mxu0 0
    %539 = vmatpush1.bf16.msra.mxu0 %v493
    %540 = vmatprep.subr.bf16.mxu0 0
    %541 = vmatpush1.bf16.msra.mxu0 %v494
    %542 = vmatprep.subr.bf16.mxu0 0
    %543 = vmatpush1.bf16.msra.mxu0 %v495
    %544 = vmatprep.mubr.bf16.mxu0 %v353
    %545 = vmatmul.mubr.bf16.gmra.mrb[0].mxu0 %v352
    %v546 = vpop.f32.mrb[0].mxu0
    %v547 = vadd.f32 0.0, %v546
    %v548 = vpop.f32.mrb[0].mxu0
    %v549 = vpop.f32.mrb[0].mxu0
    %v550 = vadd.f32 0.0, %v549
    %v551 = vpop.f32.mrb[0].mxu0
    %552 = vmatprep.mubr.bf16.mxu0 %v355
    %553 = vmatmul.mubr.bf16.gmra.mrb[0].mxu0 %v354
    %v554 = vpop.f32.mrb[0].mxu0
    %v555 = vadd.f32 0.0, %v554
    %v556 = vpop.f32.mrb[0].mxu0
    %v557 = vpop.f32.mrb[0].mxu0
    %v558 = vadd.f32 0.0, %v557
    %v559 = vpop.f32.mrb[0].mxu0
    %560 = vmatprep.mubr.bf16.mxu0 %v357
    %561 = vmatmul.mubr.bf16.gmra.mrb[0].mxu0 %v356
    %v562 = vpop.f32.mrb[0].mxu0
    %v563 = vadd.f32 0.0, %v562
    %v564 = vpop.f32.mrb[0].mxu0
    %v565 = vpop.f32.mrb[0].mxu0
    %v566 = vadd.f32 0.0, %v565
    %v567 = vpop.f32.mrb[0].mxu0
    %568 = vmatprep.mubr.bf16.mxu0 %v359
    %569 = vmatmul.mubr.bf16.gmra.mrb[0].mxu0 %v358
    %v570 = vpop.f32.mrb[0].mxu0
    %v571 = vadd.f32 0.0, %v570
    %v572 = vpop.f32.mrb[0].mxu0
    %v573 = vpop.f32.mrb[0].mxu0
    %v574 = vadd.f32 0.0, %v573
    %v575 = vpop.f32.mrb[0].mxu0
    %576 = vmatprep.mubr.bf16.mxu0 %v361
    %577 = vmatmul.mubr.bf16.gmra.mrb[0].mxu0 %v360
    %v578 = vpop.f32.mrb[0].mxu0
    %v579 = vadd.f32 0.0, %v578
    %v580 = vpop.f32.mrb[0].mxu0
    %v581 = vpop.f32.mrb[0].mxu0
    %v582 = vadd.f32 0.0, %v581
    %v583 = vpop.f32.mrb[0].mxu0
    %584 = vmatprep.mubr.bf16.mxu0 %v363
    %585 = vmatmul.mubr.bf16.gmra.mrb[0].mxu0 %v362
    %v586 = vpop.f32.mrb[0].mxu0
    %v587 = vadd.f32 0.0, %v586
    %v588 = vpop.f32.mrb[0].mxu0
    %v589 = vpop.f32.mrb[0].mxu0
    %v590 = vadd.f32 0.0, %v589
    %v591 = vpop.f32.mrb[0].mxu0
    %592 = vmatprep.mubr.bf16.mxu0 %v365
    %593 = vmatmul.mubr.bf16.gmra.mrb[0].mxu0 %v364
    %v594 = vpop.f32.mrb[0].mxu0
    %v595 = vadd.f32 0.0, %v594
    %v596 = vpop.f32.mrb[0].mxu0
    %v597 = vpop.f32.mrb[0].mxu0
    %v598 = vadd.f32 0.0, %v597
    %v599 = vpop.f32.mrb[0].mxu0
    %600 = vmatprep.mubr.bf16.mxu0 %v367
    %601 = vmatmul.mubr.bf16.gmra.mrb[0].mxu0 %v366
    %v602 = vpop.f32.mrb[0].mxu0
    %v603 = vadd.f32 0.0, %v602
    %v604 = vpop.f32.mrb[0].mxu0
    %v605 = vpop.f32.mrb[0].mxu0
    %v606 = vadd.f32 0.0, %v605
    %v607 = vpop.f32.mrb[0].mxu0
    %608 = vmatprep.mubr.bf16.mxu0 %v369
    %609 = vmatmul.mubr.bf16.gmra.mrb[0].mxu0 %v368
    %v610 = vpop.f32.mrb[0].mxu0
    %v611 = vadd.f32 0.0, %v610
    %v612 = vpop.f32.mrb[0].mxu0
    %v613 = vpop.f32.mrb[0].mxu0
    %v614 = vadd.f32 0.0, %v613
    %v615 = vpop.f32.mrb[0].mxu0
    %616 = vmatprep.mubr.bf16.mxu0 %v371
    %617 = vmatmul.mubr.bf16.gmra.mrb[0].mxu0 %v370
    %v618 = vpop.f32.mrb[0].mxu0
    %v619 = vadd.f32 0.0, %v618
    %v620 = vpop.f32.mrb[0].mxu0
    %v621 = vpop.f32.mrb[0].mxu0
    %v622 = vadd.f32 0.0, %v621
    %v623 = vpop.f32.mrb[0].mxu0
    %624 = vmatprep.mubr.bf16.mxu0 %v373
    %625 = vmatmul.mubr.bf16.gmra.mrb[0].mxu0 %v372
    %v626 = vpop.f32.mrb[0].mxu0
    %v627 = vadd.f32 0.0, %v626
    %v628 = vpop.f32.mrb[0].mxu0
    %v629 = vpop.f32.mrb[0].mxu0
    %v630 = vadd.f32 0.0, %v629
    %v631 = vpop.f32.mrb[0].mxu0
    %632 = vmatprep.mubr.bf16.mxu0 %v375
    %633 = vmatmul.mubr.bf16.gmra.mrb[0].mxu0 %v374
    %v634 = vpop.f32.mrb[0].mxu0
    %v635 = vadd.f32 0.0, %v634
    %v636 = vpop.f32.mrb[0].mxu0
    %v637 = vpop.f32.mrb[0].mxu0
    %v638 = vadd.f32 0.0, %v637
    %v639 = vpop.f32.mrb[0].mxu0
    %640 = vmatprep.mubr.bf16.mxu0 %v377
    %641 = vmatmul.mubr.bf16.gmra.mrb[0].mxu0 %v376
    %v642 = vpop.f32.mrb[0].mxu0
    %v643 = vadd.f32 0.0, %v642
    %v644 = vpop.f32.mrb[0].mxu0
    %v645 = vpop.f32.mrb[0].mxu0
    %v646 = vadd.f32 0.0, %v645
    %v647 = vpop.f32.mrb[0].mxu0
    %648 = vmatprep.mubr.bf16.mxu0 %v379
    %649 = vmatmul.mubr.bf16.gmra.mrb[0].mxu0 %v378
    %v650 = vpop.f32.mrb[0].mxu0
    %v651 = vadd.f32 0.0, %v650
    %v652 = vpop.f32.mrb[0].mxu0
    %v653 = vpop.f32.mrb[0].mxu0
    %v654 = vadd.f32 0.0, %v653
    %v655 = vpop.f32.mrb[0].mxu0
    %656 = vmatprep.mubr.bf16.mxu0 %v381
    %657 = vmatmul.mubr.bf16.gmra.mrb[0].mxu0 %v380
    %v658 = vpop.f32.mrb[0].mxu0
    %v659 = vadd.f32 0.0, %v658
    %v660 = vpop.f32.mrb[0].mxu0
    %v661 = vpop.f32.mrb[0].mxu0
    %v662 = vadd.f32 0.0, %v661
    %v663 = vpop.f32.mrb[0].mxu0
    %664 = vmatprep.mubr.bf16.mxu0 %v383
    %665 = vmatmul.mubr.bf16.gmra.mrb[0].mxu0 %v382
    %v666 = vpop.f32.mrb[0].mxu0
    %v667 = vadd.f32 0.0, %v666
    %v668 = vpop.f32.mrb[0].mxu0
    %v669 = vpop.f32.mrb[0].mxu0
    %v670 = vadd.f32 0.0, %v669
    %v671 = vpop.f32.mrb[0].mxu0
    %672 = vdwg.mxu0
    %v673 = vpack.c.bf16 %v550, %v547
    %v674 = vpack.c.bf16 %v558, %v555
    %v675 = vpack.c.bf16 %v566, %v563
    %v676 = vpack.c.bf16 %v574, %v571
    %v677 = vpack.c.bf16 %v582, %v579
    %v678 = vpack.c.bf16 %v590, %v587
    %v679 = vpack.c.bf16 %v598, %v595
    %v680 = vpack.c.bf16 %v606, %v603
    %v681 = vpack.c.bf16 %v614, %v611
    %v682 = vpack.c.bf16 %v622, %v619
    %v683 = vpack.c.bf16 %v630, %v627
    %v684 = vpack.c.bf16 %v638, %v635
    %v685 = vpack.c.bf16 %v646, %v643
    %v686 = vpack.c.bf16 %v654, %v651
    %v687 = vpack.c.bf16 %v662, %v659
    %v688 = vpack.c.bf16 %v670, %v667
    %v690 = vlaneseq
    %v691 = vshrl.u32 %v690, 7
    %v692 = vsub.s32 0, %v691
    %v693 = vrot.slane %v238, %v692
    %v711 = vunpack.c.l.b16 %v222
    %v712 = vunpack.c.l.b16 %v223
    %v713 = vunpack.c.l.b16 %v224
    %v714 = vunpack.c.l.b16 %v225
    %v715 = vunpack.c.l.b16 %v226
    %v716 = vunpack.c.l.b16 %v227
    %v717 = vunpack.c.l.b16 %v228
    %v718 = vunpack.c.l.b16 %v229
    %v719 = vunpack.c.l.b16 %v230
    %v720 = vunpack.c.l.b16 %v231
    %v721 = vunpack.c.l.b16 %v232
    %v722 = vunpack.c.l.b16 %v233
    %v723 = vunpack.c.l.b16 %v234
    %v724 = vunpack.c.l.b16 %v235
    %v725 = vunpack.c.l.b16 %v236
    %v726 = vunpack.c.l.b16 %v237
    %v727 = vpack.c.b16 %v712, %v711
    %v728 = vpack.c.b16 %v714, %v713
    %v729 = vpack.c.b16 %v716, %v715
    %v730 = vpack.c.b16 %v718, %v717
    %v731 = vpack.c.b16 %v720, %v719
    %v732 = vpack.c.b16 %v722, %v721
    %v733 = vpack.c.b16 %v724, %v723
    %v734 = vpack.c.b16 %v726, %v725
    %743 = vmatprep.subr.bf16.mxu0 0
    %744 = vmatpush1.bf16.msra.mxu0 %v727
    %745 = vmatprep.subr.bf16.mxu0 0
    %746 = vmatpush1.bf16.msra.mxu0 %v728
    %747 = vmatprep.subr.bf16.mxu0 0
    %748 = vmatpush1.bf16.msra.mxu0 %v729
    %749 = vmatprep.subr.bf16.mxu0 0
    %750 = vmatpush1.bf16.msra.mxu0 %v730
    %751 = vmatprep.subr.bf16.mxu0 0
    %752 = vmatpush1.bf16.msra.mxu0 %v731
    %753 = vmatprep.subr.bf16.mxu0 0
    %754 = vmatpush1.bf16.msra.mxu0 %v732
    %755 = vmatprep.subr.bf16.mxu0 0
    %756 = vmatpush1.bf16.msra.mxu0 %v733
    %757 = vmatprep.subr.bf16.mxu0 0
    %758 = vmatpush1.bf16.msra.mxu0 %v734
    %759 = vmatprep.subr.bf16.mxu0 0
    %760 = vmatpush1.bf16.msra.mxu0 0
    %761 = vmatprep.subr.bf16.mxu0 0
    %762 = vmatpush1.bf16.msra.mxu0 0
    %763 = vmatprep.subr.bf16.mxu0 0
    %764 = vmatpush1.bf16.msra.mxu0 0
    %765 = vmatprep.subr.bf16.mxu0 0
    %766 = vmatpush1.bf16.msra.mxu0 0
    %767 = vmatprep.subr.bf16.mxu0 0
    %768 = vmatpush1.bf16.msra.mxu0 0
    %769 = vmatprep.subr.bf16.mxu0 0
    %770 = vmatpush1.bf16.msra.mxu0 0
    %771 = vmatprep.subr.bf16.mxu0 0
    %772 = vmatpush1.bf16.msra.mxu0 0
    %773 = vmatprep.subr.bf16.mxu0 0
    %774 = vmatpush1.bf16.msra.mxu0 0
    %775 = vmatprep.mubr.bf16.mxu0 0
    %776 = vmatmul.mubr.bf16.gmra.mrb[0].mxu0 %v673
    %v777 = vpop.f32.mrb[0].mxu0
    %v778 = vadd.f32 %v693, %v777
    %v779 = vpop.f32.mrb[0].mxu0
    %v780 = vpop.f32.mrb[0].mxu0
    %v781 = vadd.f32 %v693, %v780
    %v782 = vpop.f32.mrb[0].mxu0
    %783 = vmatprep.mubr.bf16.mxu0 0
    %784 = vmatmul.mubr.bf16.gmra.mrb[0].mxu0 %v674
    %v785 = vpop.f32.mrb[0].mxu0
    %v786 = vadd.f32 %v693, %v785
    %v787 = vpop.f32.mrb[0].mxu0
    %v788 = vpop.f32.mrb[0].mxu0
    %v789 = vadd.f32 %v693, %v788
    %v790 = vpop.f32.mrb[0].mxu0
    %791 = vmatprep.mubr.bf16.mxu0 0
    %792 = vmatmul.mubr.bf16.gmra.mrb[0].mxu0 %v675
    %v793 = vpop.f32.mrb[0].mxu0
    %v794 = vadd.f32 %v693, %v793
    %v795 = vpop.f32.mrb[0].mxu0
    %v796 = vpop.f32.mrb[0].mxu0
    %v797 = vadd.f32 %v693, %v796
    %v798 = vpop.f32.mrb[0].mxu0
    %799 = vmatprep.mubr.bf16.mxu0 0
    %800 = vmatmul.mubr.bf16.gmra.mrb[0].mxu0 %v676
    %v801 = vpop.f32.mrb[0].mxu0
    %v802 = vadd.f32 %v693, %v801
    %v803 = vpop.f32.mrb[0].mxu0
    %v804 = vpop.f32.mrb[0].mxu0
    %v805 = vadd.f32 %v693, %v804
    %v806 = vpop.f32.mrb[0].mxu0
    %807 = vmatprep.mubr.bf16.mxu0 0
    %808 = vmatmul.mubr.bf16.gmra.mrb[0].mxu0 %v677
    %v809 = vpop.f32.mrb[0].mxu0
    %v810 = vadd.f32 %v693, %v809
    %v811 = vpop.f32.mrb[0].mxu0
    %v812 = vpop.f32.mrb[0].mxu0
    %v813 = vadd.f32 %v693, %v812
    %v814 = vpop.f32.mrb[0].mxu0
    %815 = vmatprep.mubr.bf16.mxu0 0
    %816 = vmatmul.mubr.bf16.gmra.mrb[0].mxu0 %v678
    %v817 = vpop.f32.mrb[0].mxu0
    %v818 = vadd.f32 %v693, %v817
    %v819 = vpop.f32.mrb[0].mxu0
    %v820 = vpop.f32.mrb[0].mxu0
    %v821 = vadd.f32 %v693, %v820
    %v822 = vpop.f32.mrb[0].mxu0
    %823 = vmatprep.mubr.bf16.mxu0 0
    %824 = vmatmul.mubr.bf16.gmra.mrb[0].mxu0 %v679
    %v825 = vpop.f32.mrb[0].mxu0
    %v826 = vadd.f32 %v693, %v825
    %v827 = vpop.f32.mrb[0].mxu0
    %v828 = vpop.f32.mrb[0].mxu0
    %v829 = vadd.f32 %v693, %v828
    %v830 = vpop.f32.mrb[0].mxu0
    %831 = vmatprep.mubr.bf16.mxu0 0
    %832 = vmatmul.mubr.bf16.gmra.mrb[0].mxu0 %v680
    %v833 = vpop.f32.mrb[0].mxu0
    %v834 = vadd.f32 %v693, %v833
    %v835 = vpop.f32.mrb[0].mxu0
    %v836 = vpop.f32.mrb[0].mxu0
    %v837 = vadd.f32 %v693, %v836
    %v838 = vpop.f32.mrb[0].mxu0
    %839 = vmatprep.mubr.bf16.mxu0 0
    %840 = vmatmul.mubr.bf16.gmra.mrb[0].mxu0 %v681
    %v841 = vpop.f32.mrb[0].mxu0
    %v842 = vadd.f32 %v693, %v841
    %v843 = vpop.f32.mrb[0].mxu0
    %v844 = vpop.f32.mrb[0].mxu0
    %v845 = vadd.f32 %v693, %v844
    %v846 = vpop.f32.mrb[0].mxu0
    %847 = vmatprep.mubr.bf16.mxu0 0
    %848 = vmatmul.mubr.bf16.gmra.mrb[0].mxu0 %v682
    %v849 = vpop.f32.mrb[0].mxu0
    %v850 = vadd.f32 %v693, %v849
    %v851 = vpop.f32.mrb[0].mxu0
    %v852 = vpop.f32.mrb[0].mxu0
    %v853 = vadd.f32 %v693, %v852
    %v854 = vpop.f32.mrb[0].mxu0
    %855 = vmatprep.mubr.bf16.mxu0 0
    %856 = vmatmul.mubr.bf16.gmra.mrb[0].mxu0 %v683
    %v857 = vpop.f32.mrb[0].mxu0
    %v858 = vadd.f32 %v693, %v857
    %v859 = vpop.f32.mrb[0].mxu0
    %v860 = vpop.f32.mrb[0].mxu0
    %v861 = vadd.f32 %v693, %v860
    %v862 = vpop.f32.mrb[0].mxu0
    %863 = vmatprep.mubr.bf16.mxu0 0
    %864 = vmatmul.mubr.bf16.gmra.mrb[0].mxu0 %v684
    %v865 = vpop.f32.mrb[0].mxu0
    %v866 = vadd.f32 %v693, %v865
    %v867 = vpop.f32.mrb[0].mxu0
    %v868 = vpop.f32.mrb[0].mxu0
    %v869 = vadd.f32 %v693, %v868
    %v870 = vpop.f32.mrb[0].mxu0
    %871 = vmatprep.mubr.bf16.mxu0 0
    %872 = vmatmul.mubr.bf16.gmra.mrb[0].mxu0 %v685
    %v873 = vpop.f32.mrb[0].mxu0
    %v874 = vadd.f32 %v693, %v873
    %v875 = vpop.f32.mrb[0].mxu0
    %v876 = vpop.f32.mrb[0].mxu0
    %v877 = vadd.f32 %v693, %v876
    %v878 = vpop.f32.mrb[0].mxu0
    %879 = vmatprep.mubr.bf16.mxu0 0
    %880 = vmatmul.mubr.bf16.gmra.mrb[0].mxu0 %v686
    %v881 = vpop.f32.mrb[0].mxu0
    %v882 = vadd.f32 %v693, %v881
    %v883 = vpop.f32.mrb[0].mxu0
    %v884 = vpop.f32.mrb[0].mxu0
    %v885 = vadd.f32 %v693, %v884
    %v886 = vpop.f32.mrb[0].mxu0
    %887 = vmatprep.mubr.bf16.mxu0 0
    %888 = vmatmul.mubr.bf16.gmra.mrb[0].mxu0 %v687
    %v889 = vpop.f32.mrb[0].mxu0
    %v890 = vadd.f32 %v693, %v889
    %v891 = vpop.f32.mrb[0].mxu0
    %v892 = vpop.f32.mrb[0].mxu0
    %v893 = vadd.f32 %v693, %v892
    %v894 = vpop.f32.mrb[0].mxu0
    %895 = vmatprep.mubr.bf16.mxu0 0
    %896 = vmatmul.mubr.bf16.gmra.mrb[0].mxu0 %v688
    %v897 = vpop.f32.mrb[0].mxu0
    %v898 = vadd.f32 %v693, %v897
    %v899 = vpop.f32.mrb[0].mxu0
    %v900 = vpop.f32.mrb[0].mxu0
    %v901 = vadd.f32 %v693, %v900
    %v902 = vpop.f32.mrb[0].mxu0
    %903 = vdwg.mxu0
    %v904 = vmax.f32 %v778, 0.0
    %v905 = vmax.f32 %v781, 0.0
    %v906 = vmax.f32 %v786, 0.0
    %v907 = vmax.f32 %v789, 0.0
    %v908 = vmax.f32 %v794, 0.0
    %v909 = vmax.f32 %v797, 0.0
    %v910 = vmax.f32 %v802, 0.0
    %v911 = vmax.f32 %v805, 0.0
    %v912 = vmax.f32 %v810, 0.0
    %v913 = vmax.f32 %v813, 0.0
    %v914 = vmax.f32 %v818, 0.0
    %v915 = vmax.f32 %v821, 0.0
    %v916 = vmax.f32 %v826, 0.0
    %v917 = vmax.f32 %v829, 0.0
    %v918 = vmax.f32 %v834, 0.0
    %v919 = vmax.f32 %v837, 0.0
    %v920 = vmax.f32 %v842, 0.0
    %v921 = vmax.f32 %v845, 0.0
    %v922 = vmax.f32 %v850, 0.0
    %v923 = vmax.f32 %v853, 0.0
    %v924 = vmax.f32 %v858, 0.0
    %v925 = vmax.f32 %v861, 0.0
    %v926 = vmax.f32 %v866, 0.0
    %v927 = vmax.f32 %v869, 0.0
    %v928 = vmax.f32 %v874, 0.0
    %v929 = vmax.f32 %v877, 0.0
    %v930 = vmax.f32 %v882, 0.0
    %v931 = vmax.f32 %v885, 0.0
    %v932 = vmax.f32 %v890, 0.0
    %v933 = vmax.f32 %v893, 0.0
    %v934 = vmax.f32 %v898, 0.0
    %v935 = vmax.f32 %v901, 0.0
    %v936 = vpack.c.bf16 %v905, %v904
    %v937 = vpack.c.bf16 %v907, %v906
    %v938 = vpack.c.bf16 %v909, %v908
    %v939 = vpack.c.bf16 %v911, %v910
    %v940 = vpack.c.bf16 %v913, %v912
    %v941 = vpack.c.bf16 %v915, %v914
    %v942 = vpack.c.bf16 %v917, %v916
    %v943 = vpack.c.bf16 %v919, %v918
    %v944 = vpack.c.bf16 %v921, %v920
    %v945 = vpack.c.bf16 %v923, %v922
    %v946 = vpack.c.bf16 %v925, %v924
    %v947 = vpack.c.bf16 %v927, %v926
    %v948 = vpack.c.bf16 %v929, %v928
    %v949 = vpack.c.bf16 %v931, %v930
    %v950 = vpack.c.bf16 %v933, %v932
    %v951 = vpack.c.bf16 %v935, %v934
    %v953 = vlaneseq
    %v954 = vshrl.u32 %v953, 7
    %v955 = vsub.s32 0, %v954
    %v956 = vrot.slane %v255, %v955
    %v974 = vunpack.c.l.b16 %v239
    %v975 = vunpack.c.l.b16 %v240
    %v976 = vunpack.c.l.b16 %v241
    %v977 = vunpack.c.l.b16 %v242
    %v978 = vunpack.c.l.b16 %v243
    %v979 = vunpack.c.l.b16 %v244
    %v980 = vunpack.c.l.b16 %v245
    %v981 = vunpack.c.l.b16 %v246
    %v982 = vunpack.c.l.b16 %v247
    %v983 = vunpack.c.l.b16 %v248
    %v984 = vunpack.c.l.b16 %v249
    %v985 = vunpack.c.l.b16 %v250
    %v986 = vunpack.c.l.b16 %v251
    %v987 = vunpack.c.l.b16 %v252
    %v988 = vunpack.c.l.b16 %v253
    %v989 = vunpack.c.l.b16 %v254
    %v990 = vpack.c.b16 %v975, %v974
    %v991 = vpack.c.b16 %v977, %v976
    %v992 = vpack.c.b16 %v979, %v978
    %v993 = vpack.c.b16 %v981, %v980
    %v994 = vpack.c.b16 %v983, %v982
    %v995 = vpack.c.b16 %v985, %v984
    %v996 = vpack.c.b16 %v987, %v986
    %v997 = vpack.c.b16 %v989, %v988
    %1006 = vmatprep.subr.bf16.mxu0 0
    %1007 = vmatpush1.bf16.msra.mxu0 %v990
    %1008 = vmatprep.subr.bf16.mxu0 0
    %1009 = vmatpush1.bf16.msra.mxu0 %v991
    %1010 = vmatprep.subr.bf16.mxu0 0
    %1011 = vmatpush1.bf16.msra.mxu0 %v992
    %1012 = vmatprep.subr.bf16.mxu0 0
    %1013 = vmatpush1.bf16.msra.mxu0 %v993
    %1014 = vmatprep.subr.bf16.mxu0 0
    %1015 = vmatpush1.bf16.msra.mxu0 %v994
    %1016 = vmatprep.subr.bf16.mxu0 0
    %1017 = vmatpush1.bf16.msra.mxu0 %v995
    %1018 = vmatprep.subr.bf16.mxu0 0
    %1019 = vmatpush1.bf16.msra.mxu0 %v996
    %1020 = vmatprep.subr.bf16.mxu0 0
    %1021 = vmatpush1.bf16.msra.mxu0 %v997
    %1022 = vmatprep.subr.bf16.mxu0 0
    %1023 = vmatpush1.bf16.msra.mxu0 0
    %1024 = vmatprep.subr.bf16.mxu0 0
    %1025 = vmatpush1.bf16.msra.mxu0 0
    %1026 = vmatprep.subr.bf16.mxu0 0
    %1027 = vmatpush1.bf16.msra.mxu0 0
    %1028 = vmatprep.subr.bf16.mxu0 0
    %1029 = vmatpush1.bf16.msra.mxu0 0
    %1030 = vmatprep.subr.bf16.mxu0 0
    %1031 = vmatpush1.bf16.msra.mxu0 0
    %1032 = vmatprep.subr.bf16.mxu0 0
    %1033 = vmatpush1.bf16.msra.mxu0 0
    %1034 = vmatprep.subr.bf16.mxu0 0
    %1035 = vmatpush1.bf16.msra.mxu0 0
    %1036 = vmatprep.subr.bf16.mxu0 0
    %1037 = vmatpush1.bf16.msra.mxu0 0
    %1038 = vmatprep.mubr.bf16.mxu0 0
    %1039 = vmatmul.mubr.bf16.gmra.mrb[0].mxu0 %v936
    %v1040 = vpop.f32.mrb[0].mxu0
    %v1041 = vadd.f32 %v956, %v1040
    %v1042 = vpop.f32.mrb[0].mxu0
    %v1043 = vpop.f32.mrb[0].mxu0
    %v1044 = vadd.f32 %v956, %v1043
    %v1045 = vpop.f32.mrb[0].mxu0
    %1046 = vmatprep.mubr.bf16.mxu0 0
    %1047 = vmatmul.mubr.bf16.gmra.mrb[0].mxu0 %v937
    %v1048 = vpop.f32.mrb[0].mxu0
    %v1049 = vadd.f32 %v956, %v1048
    %v1050 = vpop.f32.mrb[0].mxu0
    %v1051 = vpop.f32.mrb[0].mxu0
    %v1052 = vadd.f32 %v956, %v1051
    %v1053 = vpop.f32.mrb[0].mxu0
    %1054 = vmatprep.mubr.bf16.mxu0 0
    %1055 = vmatmul.mubr.bf16.gmra.mrb[0].mxu0 %v938
    %v1056 = vpop.f32.mrb[0].mxu0
    %v1057 = vadd.f32 %v956, %v1056
    %v1058 = vpop.f32.mrb[0].mxu0
    %v1059 = vpop.f32.mrb[0].mxu0
    %v1060 = vadd.f32 %v956, %v1059
    %v1061 = vpop.f32.mrb[0].mxu0
    %1062 = vmatprep.mubr.bf16.mxu0 0
    %1063 = vmatmul.mubr.bf16.gmra.mrb[0].mxu0 %v939
    %v1064 = vpop.f32.mrb[0].mxu0
    %v1065 = vadd.f32 %v956, %v1064
    %v1066 = vpop.f32.mrb[0].mxu0
    %v1067 = vpop.f32.mrb[0].mxu0
    %v1068 = vadd.f32 %v956, %v1067
    %v1069 = vpop.f32.mrb[0].mxu0
    %1070 = vmatprep.mubr.bf16.mxu0 0
    %1071 = vmatmul.mubr.bf16.gmra.mrb[0].mxu0 %v940
    %v1072 = vpop.f32.mrb[0].mxu0
    %v1073 = vadd.f32 %v956, %v1072
    %v1074 = vpop.f32.mrb[0].mxu0
    %v1075 = vpop.f32.mrb[0].mxu0
    %v1076 = vadd.f32 %v956, %v1075
    %v1077 = vpop.f32.mrb[0].mxu0
    %1078 = vmatprep.mubr.bf16.mxu0 0
    %1079 = vmatmul.mubr.bf16.gmra.mrb[0].mxu0 %v941
    %v1080 = vpop.f32.mrb[0].mxu0
    %v1081 = vadd.f32 %v956, %v1080
    %v1082 = vpop.f32.mrb[0].mxu0
    %v1083 = vpop.f32.mrb[0].mxu0
    %v1084 = vadd.f32 %v956, %v1083
    %v1085 = vpop.f32.mrb[0].mxu0
    %1086 = vmatprep.mubr.bf16.mxu0 0
    %1087 = vmatmul.mubr.bf16.gmra.mrb[0].mxu0 %v942
    %v1088 = vpop.f32.mrb[0].mxu0
    %v1089 = vadd.f32 %v956, %v1088
    %v1090 = vpop.f32.mrb[0].mxu0
    %v1091 = vpop.f32.mrb[0].mxu0
    %v1092 = vadd.f32 %v956, %v1091
    %v1093 = vpop.f32.mrb[0].mxu0
    %1094 = vmatprep.mubr.bf16.mxu0 0
    %1095 = vmatmul.mubr.bf16.gmra.mrb[0].mxu0 %v943
    %v1096 = vpop.f32.mrb[0].mxu0
    %v1097 = vadd.f32 %v956, %v1096
    %v1098 = vpop.f32.mrb[0].mxu0
    %v1099 = vpop.f32.mrb[0].mxu0
    %v1100 = vadd.f32 %v956, %v1099
    %v1101 = vpop.f32.mrb[0].mxu0
    %1102 = vmatprep.mubr.bf16.mxu0 0
    %1103 = vmatmul.mubr.bf16.gmra.mrb[0].mxu0 %v944
    %v1104 = vpop.f32.mrb[0].mxu0
    %v1105 = vadd.f32 %v956, %v1104
    %v1106 = vpop.f32.mrb[0].mxu0
    %v1107 = vpop.f32.mrb[0].mxu0
    %v1108 = vadd.f32 %v956, %v1107
    %v1109 = vpop.f32.mrb[0].mxu0
    %1110 = vmatprep.mubr.bf16.mxu0 0
    %1111 = vmatmul.mubr.bf16.gmra.mrb[0].mxu0 %v945
    %v1112 = vpop.f32.mrb[0].mxu0
    %v1113 = vadd.f32 %v956, %v1112
    %v1114 = vpop.f32.mrb[0].mxu0
    %v1115 = vpop.f32.mrb[0].mxu0
    %v1116 = vadd.f32 %v956, %v1115
    %v1117 = vpop.f32.mrb[0].mxu0
    %1118 = vmatprep.mubr.bf16.mxu0 0
    %1119 = vmatmul.mubr.bf16.gmra.mrb[0].mxu0 %v946
    %v1120 = vpop.f32.mrb[0].mxu0
    %v1121 = vadd.f32 %v956, %v1120
    %v1122 = vpop.f32.mrb[0].mxu0
    %v1123 = vpop.f32.mrb[0].mxu0
    %v1124 = vadd.f32 %v956, %v1123
    %v1125 = vpop.f32.mrb[0].mxu0
    %1126 = vmatprep.mubr.bf16.mxu0 0
    %1127 = vmatmul.mubr.bf16.gmra.mrb[0].mxu0 %v947
    %v1128 = vpop.f32.mrb[0].mxu0
    %v1129 = vadd.f32 %v956, %v1128
    %v1130 = vpop.f32.mrb[0].mxu0
    %v1131 = vpop.f32.mrb[0].mxu0
    %v1132 = vadd.f32 %v956, %v1131
    %v1133 = vpop.f32.mrb[0].mxu0
    %1134 = vmatprep.mubr.bf16.mxu0 0
    %1135 = vmatmul.mubr.bf16.gmra.mrb[0].mxu0 %v948
    %v1136 = vpop.f32.mrb[0].mxu0
    %v1137 = vadd.f32 %v956, %v1136
    %v1138 = vpop.f32.mrb[0].mxu0
    %v1139 = vpop.f32.mrb[0].mxu0
    %v1140 = vadd.f32 %v956, %v1139
    %v1141 = vpop.f32.mrb[0].mxu0
    %1142 = vmatprep.mubr.bf16.mxu0 0
    %1143 = vmatmul.mubr.bf16.gmra.mrb[0].mxu0 %v949
    %v1144 = vpop.f32.mrb[0].mxu0
    %v1145 = vadd.f32 %v956, %v1144
    %v1146 = vpop.f32.mrb[0].mxu0
    %v1147 = vpop.f32.mrb[0].mxu0
    %v1148 = vadd.f32 %v956, %v1147
    %v1149 = vpop.f32.mrb[0].mxu0
    %1150 = vmatprep.mubr.bf16.mxu0 0
    %1151 = vmatmul.mubr.bf16.gmra.mrb[0].mxu0 %v950
    %v1152 = vpop.f32.mrb[0].mxu0
    %v1153 = vadd.f32 %v956, %v1152
    %v1154 = vpop.f32.mrb[0].mxu0
    %v1155 = vpop.f32.mrb[0].mxu0
    %v1156 = vadd.f32 %v956, %v1155
    %v1157 = vpop.f32.mrb[0].mxu0
    %1158 = vmatprep.mubr.bf16.mxu0 0
    %1159 = vmatmul.mubr.bf16.gmra.mrb[0].mxu0 %v951
    %v1160 = vpop.f32.mrb[0].mxu0
    %v1161 = vadd.f32 %v956, %v1160
    %v1162 = vpop.f32.mrb[0].mxu0
    %v1163 = vpop.f32.mrb[0].mxu0
    %v1164 = vadd.f32 %v956, %v1163
    %v1165 = vpop.f32.mrb[0].mxu0
    %1166 = vdwg.mxu0
    %v1167 = vmax.f32 %v1041, 0.0
    %v1168 = vmax.f32 %v1044, 0.0
    %v1169 = vmax.f32 %v1049, 0.0
    %v1170 = vmax.f32 %v1052, 0.0
    %v1171 = vmax.f32 %v1057, 0.0
    %v1172 = vmax.f32 %v1060, 0.0
    %v1173 = vmax.f32 %v1065, 0.0
    %v1174 = vmax.f32 %v1068, 0.0
    %v1175 = vmax.f32 %v1073, 0.0
    %v1176 = vmax.f32 %v1076, 0.0
    %v1177 = vmax.f32 %v1081, 0.0
    %v1178 = vmax.f32 %v1084, 0.0
    %v1179 = vmax.f32 %v1089, 0.0
    %v1180 = vmax.f32 %v1092, 0.0
    %v1181 = vmax.f32 %v1097, 0.0
    %v1182 = vmax.f32 %v1100, 0.0
    %v1183 = vmax.f32 %v1105, 0.0
    %v1184 = vmax.f32 %v1108, 0.0
    %v1185 = vmax.f32 %v1113, 0.0
    %v1186 = vmax.f32 %v1116, 0.0
    %v1187 = vmax.f32 %v1121, 0.0
    %v1188 = vmax.f32 %v1124, 0.0
    %v1189 = vmax.f32 %v1129, 0.0
    %v1190 = vmax.f32 %v1132, 0.0
    %v1191 = vmax.f32 %v1137, 0.0
    %v1192 = vmax.f32 %v1140, 0.0
    %v1193 = vmax.f32 %v1145, 0.0
    %v1194 = vmax.f32 %v1148, 0.0
    %v1195 = vmax.f32 %v1153, 0.0
    %v1196 = vmax.f32 %v1156, 0.0
    %v1197 = vmax.f32 %v1161, 0.0
    %v1198 = vmax.f32 %v1164, 0.0
    %v1199 = vpack.c.bf16 %v1168, %v1167
    %v1200 = vpack.c.bf16 %v1170, %v1169
    %v1201 = vpack.c.bf16 %v1172, %v1171
    %v1202 = vpack.c.bf16 %v1174, %v1173
    %v1203 = vpack.c.bf16 %v1176, %v1175
    %v1204 = vpack.c.bf16 %v1178, %v1177
    %v1205 = vpack.c.bf16 %v1180, %v1179
    %v1206 = vpack.c.bf16 %v1182, %v1181
    %v1207 = vpack.c.bf16 %v1184, %v1183
    %v1208 = vpack.c.bf16 %v1186, %v1185
    %v1209 = vpack.c.bf16 %v1188, %v1187
    %v1210 = vpack.c.bf16 %v1190, %v1189
    %v1211 = vpack.c.bf16 %v1192, %v1191
    %v1212 = vpack.c.bf16 %v1194, %v1193
    %v1213 = vpack.c.bf16 %v1196, %v1195
    %v1214 = vpack.c.bf16 %v1198, %v1197
    %v1215 = vld [vmem:[#allocation10] sm:$0xf]
    %v1216 = vld [vmem:[#allocation10 + $0x4] sm:$0xf]
    %v1217 = vld [vmem:[#allocation10 + $0x8] sm:$0xf]
    %v1218 = vld [vmem:[#allocation10 + $0xc] sm:$0xf]
    %v1219 = vld [vmem:[#allocation10 + $0x10] sm:$0xf]
    %v1220 = vld [vmem:[#allocation10 + $0x14] sm:$0xf]
    %v1221 = vld [vmem:[#allocation10 + $0x18] sm:$0xf]
    %v1222 = vld [vmem:[#allocation10 + $0x1c] sm:$0xf]
    %v1223 = vld [vmem:[#allocation10 + $0x20] sm:$0xf]
    %v1224 = vld [vmem:[#allocation10 + $0x24] sm:$0xf]
    %v1225 = vld [vmem:[#allocation10 + $0x28] sm:$0xf]
    %v1226 = vld [vmem:[#allocation10 + $0x2c] sm:$0xf]
    %v1227 = vld [vmem:[#allocation10 + $0x30] sm:$0xf]
    %v1228 = vld [vmem:[#allocation10 + $0x34] sm:$0xf]
    %v1229 = vld [vmem:[#allocation10 + $0x38] sm:$0xf]
    %v1230 = vld [vmem:[#allocation10 + $0x3c] sm:$0xf]
    %v1231 = vld [vmem:[%s7] sm:$0x1]
    %v1232 = vld [vmem:[#allocation11] sm:$0xf]
    %v1233 = vld [vmem:[#allocation11 + $0x4] sm:$0xf]
    %v1234 = vld [vmem:[#allocation11 + $0x8] sm:$0xf]
    %v1235 = vld [vmem:[#allocation11 + $0xc] sm:$0xf]
    %v1236 = vld [vmem:[#allocation11 + $0x10] sm:$0xf]
    %v1237 = vld [vmem:[#allocation11 + $0x14] sm:$0xf]
    %v1238 = vld [vmem:[#allocation11 + $0x18] sm:$0xf]
    %v1239 = vld [vmem:[#allocation11 + $0x1c] sm:$0xf]
    %v1240 = vld [vmem:[#allocation11 + $0x20] sm:$0xf]
    %v1241 = vld [vmem:[#allocation11 + $0x24] sm:$0xf]
    %v1242 = vld [vmem:[#allocation11 + $0x28] sm:$0xf]
    %v1243 = vld [vmem:[#allocation11 + $0x2c] sm:$0xf]
    %v1244 = vld [vmem:[#allocation11 + $0x30] sm:$0xf]
    %v1245 = vld [vmem:[#allocation11 + $0x34] sm:$0xf]
    %v1246 = vld [vmem:[#allocation11 + $0x38] sm:$0xf]
    %v1247 = vld [vmem:[#allocation11 + $0x3c] sm:$0xf]
    %v1248 = vld [vmem:[%s9] sm:$0x1]
    %1249 = vmatprep.subr.bf16.mxu0 0
    %1250 = vmatpush1.bf16.msra.mxu0 %v1199
    %1251 = vmatprep.subr.bf16.mxu0 0
    %1252 = vmatpush1.bf16.msra.mxu0 %v1200
    %1253 = vmatprep.subr.bf16.mxu0 0
    %1254 = vmatpush1.bf16.msra.mxu0 %v1201
    %1255 = vmatprep.subr.bf16.mxu0 0
    %1256 = vmatpush1.bf16.msra.mxu0 %v1202
    %1257 = vmatprep.subr.bf16.mxu0 0
    %1258 = vmatpush1.bf16.msra.mxu0 %v1203
    %1259 = vmatprep.subr.bf16.mxu0 0
    %1260 = vmatpush1.bf16.msra.mxu0 %v1204
    %1261 = vmatprep.subr.bf16.mxu0 0
    %1262 = vmatpush1.bf16.msra.mxu0 %v1205
    %1263 = vmatprep.subr.bf16.mxu0 0
    %1264 = vmatpush1.bf16.msra.mxu0 %v1206
    %1265 = vmatprep.subr.bf16.mxu0 0
    %1266 = vmatpush1.bf16.msra.mxu0 %v1207
    %1267 = vmatprep.subr.bf16.mxu0 0
    %1268 = vmatpush1.bf16.msra.mxu0 %v1208
    %1269 = vmatprep.subr.bf16.mxu0 0
    %1270 = vmatpush1.bf16.msra.mxu0 %v1209
    %1271 = vmatprep.subr.bf16.mxu0 0
    %1272 = vmatpush1.bf16.msra.mxu0 %v1210
    %1273 = vmatprep.subr.bf16.mxu0 0
    %1274 = vmatpush1.bf16.msra.mxu0 %v1211
    %1275 = vmatprep.subr.bf16.mxu0 0
    %1276 = vmatpush1.bf16.msra.mxu0 %v1212
    %1277 = vmatprep.subr.bf16.mxu0 0
    %1278 = vmatpush1.bf16.msra.mxu0 %v1213
    %1279 = vmatprep.subr.bf16.mxu0 0
    %1280 = vmatpush1.bf16.msra.mxu0 %v1214
    %1281 = vmatprep.mubr.bf16.mxu0 %v353
    %1282 = vmatmul.mubr.bf16.gmra.mrb[0].mxu0 %v352
    %v1283 = vpop.f32.mrb[0].mxu0
    %v1284 = vadd.f32 0.0, %v1283
    %v1285 = vpop.f32.mrb[0].mxu0
    %v1286 = vpop.f32.mrb[0].mxu0
    %v1287 = vadd.f32 0.0, %v1286
    %v1288 = vpop.f32.mrb[0].mxu0
    %1289 = vmatprep.mubr.bf16.mxu0 %v355
    %1290 = vmatmul.mubr.bf16.gmra.mrb[0].mxu0 %v354
    %v1291 = vpop.f32.mrb[0].mxu0
    %v1292 = vadd.f32 0.0, %v1291
    %v1293 = vpop.f32.mrb[0].mxu0
    %v1294 = vpop.f32.mrb[0].mxu0
    %v1295 = vadd.f32 0.0, %v1294
    %v1296 = vpop.f32.mrb[0].mxu0
    %1297 = vmatprep.mubr.bf16.mxu0 %v357
    %1298 = vmatmul.mubr.bf16.gmra.mrb[0].mxu0 %v356
    %v1299 = vpop.f32.mrb[0].mxu0
    %v1300 = vadd.f32 0.0, %v1299
    %v1301 = vpop.f32.mrb[0].mxu0
    %v1302 = vpop.f32.mrb[0].mxu0
    %v1303 = vadd.f32 0.0, %v1302
    %v1304 = vpop.f32.mrb[0].mxu0
    %1305 = vmatprep.mubr.bf16.mxu0 %v359
    %1306 = vmatmul.mubr.bf16.gmra.mrb[0].mxu0 %v358
    %v1307 = vpop.f32.mrb[0].mxu0
    %v1308 = vadd.f32 0.0, %v1307
    %v1309 = vpop.f32.mrb[0].mxu0
    %v1310 = vpop.f32.mrb[0].mxu0
    %v1311 = vadd.f32 0.0, %v1310
    %v1312 = vpop.f32.mrb[0].mxu0
    %1313 = vmatprep.mubr.bf16.mxu0 %v361
    %1314 = vmatmul.mubr.bf16.gmra.mrb[0].mxu0 %v360
    %v1315 = vpop.f32.mrb[0].mxu0
    %v1316 = vadd.f32 0.0, %v1315
    %v1317 = vpop.f32.mrb[0].mxu0
    %v1318 = vpop.f32.mrb[0].mxu0
    %v1319 = vadd.f32 0.0, %v1318
    %v1320 = vpop.f32.mrb[0].mxu0
    %1321 = vmatprep.mubr.bf16.mxu0 %v363
    %1322 = vmatmul.mubr.bf16.gmra.mrb[0].mxu0 %v362
    %v1323 = vpop.f32.mrb[0].mxu0
    %v1324 = vadd.f32 0.0, %v1323
    %v1325 = vpop.f32.mrb[0].mxu0
    %v1326 = vpop.f32.mrb[0].mxu0
    %v1327 = vadd.f32 0.0, %v1326
    %v1328 = vpop.f32.mrb[0].mxu0
    %1329 = vmatprep.mubr.bf16.mxu0 %v365
    %1330 = vmatmul.mubr.bf16.gmra.mrb[0].mxu0 %v364
    %v1331 = vpop.f32.mrb[0].mxu0
    %v1332 = vadd.f32 0.0, %v1331
    %v1333 = vpop.f32.mrb[0].mxu0
    %v1334 = vpop.f32.mrb[0].mxu0
    %v1335 = vadd.f32 0.0, %v1334
    %v1336 = vpop.f32.mrb[0].mxu0
    %1337 = vmatprep.mubr.bf16.mxu0 %v367
    %1338 = vmatmul.mubr.bf16.gmra.mrb[0].mxu0 %v366
    %v1339 = vpop.f32.mrb[0].mxu0
    %v1340 = vadd.f32 0.0, %v1339
    %v1341 = vpop.f32.mrb[0].mxu0
    %v1342 = vpop.f32.mrb[0].mxu0
    %v1343 = vadd.f32 0.0, %v1342
    %v1344 = vpop.f32.mrb[0].mxu0
    %1345 = vmatprep.mubr.bf16.mxu0 %v369
    %1346 = vmatmul.mubr.bf16.gmra.mrb[0].mxu0 %v368
    %v1347 = vpop.f32.mrb[0].mxu0
    %v1348 = vadd.f32 0.0, %v1347
    %v1349 = vpop.f32.mrb[0].mxu0
    %v1350 = vpop.f32.mrb[0].mxu0
    %v1351 = vadd.f32 0.0, %v1350
    %v1352 = vpop.f32.mrb[0].mxu0
    %1353 = vmatprep.mubr.bf16.mxu0 %v371
    %1354 = vmatmul.mubr.bf16.gmra.mrb[0].mxu0 %v370
    %v1355 = vpop.f32.mrb[0].mxu0
    %v1356 = vadd.f32 0.0, %v1355
    %v1357 = vpop.f32.mrb[0].mxu0
    %v1358 = vpop.f32.mrb[0].mxu0
    %v1359 = vadd.f32 0.0, %v1358
    %v1360 = vpop.f32.mrb[0].mxu0
    %1361 = vmatprep.mubr.bf16.mxu0 %v373
    %1362 = vmatmul.mubr.bf16.gmra.mrb[0].mxu0 %v372
    %v1363 = vpop.f32.mrb[0].mxu0
    %v1364 = vadd.f32 0.0, %v1363
    %v1365 = vpop.f32.mrb[0].mxu0
    %v1366 = vpop.f32.mrb[0].mxu0
    %v1367 = vadd.f32 0.0, %v1366
    %v1368 = vpop.f32.mrb[0].mxu0
    %1369 = vmatprep.mubr.bf16.mxu0 %v375
    %1370 = vmatmul.mubr.bf16.gmra.mrb[0].mxu0 %v374
    %v1371 = vpop.f32.mrb[0].mxu0
    %v1372 = vadd.f32 0.0, %v1371
    %v1373 = vpop.f32.mrb[0].mxu0
    %v1374 = vpop.f32.mrb[0].mxu0
    %v1375 = vadd.f32 0.0, %v1374
    %v1376 = vpop.f32.mrb[0].mxu0
    %1377 = vmatprep.mubr.bf16.mxu0 %v377
    %1378 = vmatmul.mubr.bf16.gmra.mrb[0].mxu0 %v376
    %v1379 = vpop.f32.mrb[0].mxu0
    %v1380 = vadd.f32 0.0, %v1379
    %v1381 = vpop.f32.mrb[0].mxu0
    %v1382 = vpop.f32.mrb[0].mxu0
    %v1383 = vadd.f32 0.0, %v1382
    %v1384 = vpop.f32.mrb[0].mxu0
    %1385 = vmatprep.mubr.bf16.mxu0 %v379
    %1386 = vmatmul.mubr.bf16.gmra.mrb[0].mxu0 %v378
    %v1387 = vpop.f32.mrb[0].mxu0
    %v1388 = vadd.f32 0.0, %v1387
    %v1389 = vpop.f32.mrb[0].mxu0
    %v1390 = vpop.f32.mrb[0].mxu0
    %v1391 = vadd.f32 0.0, %v1390
    %v1392 = vpop.f32.mrb[0].mxu0
    %1393 = vmatprep.mubr.bf16.mxu0 %v381
    %1394 = vmatmul.mubr.bf16.gmra.mrb[0].mxu0 %v380
    %v1395 = vpop.f32.mrb[0].mxu0
    %v1396 = vadd.f32 0.0, %v1395
    %v1397 = vpop.f32.mrb[0].mxu0
    %v1398 = vpop.f32.mrb[0].mxu0
    %v1399 = vadd.f32 0.0, %v1398
    %v1400 = vpop.f32.mrb[0].mxu0
    %1401 = vmatprep.mubr.bf16.mxu0 %v383
    %1402 = vmatmul.mubr.bf16.gmra.mrb[0].mxu0 %v382
    %v1403 = vpop.f32.mrb[0].mxu0
    %v1404 = vadd.f32 0.0, %v1403
    %v1405 = vpop.f32.mrb[0].mxu0
    %v1406 = vpop.f32.mrb[0].mxu0
    %v1407 = vadd.f32 0.0, %v1406
    %v1408 = vpop.f32.mrb[0].mxu0
    %1409 = vdwg.mxu0
    %v1410 = vpack.c.bf16 %v1287, %v1284
    %v1411 = vpack.c.bf16 %v1295, %v1292
    %v1412 = vpack.c.bf16 %v1303, %v1300
    %v1413 = vpack.c.bf16 %v1311, %v1308
    %v1414 = vpack.c.bf16 %v1319, %v1316
    %v1415 = vpack.c.bf16 %v1327, %v1324
    %v1416 = vpack.c.bf16 %v1335, %v1332
    %v1417 = vpack.c.bf16 %v1343, %v1340
    %v1418 = vpack.c.bf16 %v1351, %v1348
    %v1419 = vpack.c.bf16 %v1359, %v1356
    %v1420 = vpack.c.bf16 %v1367, %v1364
    %v1421 = vpack.c.bf16 %v1375, %v1372
    %v1422 = vpack.c.bf16 %v1383, %v1380
    %v1423 = vpack.c.bf16 %v1391, %v1388
    %v1424 = vpack.c.bf16 %v1399, %v1396
    %v1425 = vpack.c.bf16 %v1407, %v1404
    %v1427 = vlaneseq
    %v1428 = vshrl.u32 %v1427, 7
    %v1429 = vsub.s32 0, %v1428
    %v1430 = vrot.slane %v1231, %v1429
    %v1448 = vunpack.c.l.b16 %v1215
    %v1449 = vunpack.c.l.b16 %v1216
    %v1450 = vunpack.c.l.b16 %v1217
    %v1451 = vunpack.c.l.b16 %v1218
    %v1452 = vunpack.c.l.b16 %v1219
    %v1453 = vunpack.c.l.b16 %v1220
    %v1454 = vunpack.c.l.b16 %v1221
    %v1455 = vunpack.c.l.b16 %v1222
    %v1456 = vunpack.c.l.b16 %v1223
    %v1457 = vunpack.c.l.b16 %v1224
    %v1458 = vunpack.c.l.b16 %v1225
    %v1459 = vunpack.c.l.b16 %v1226
    %v1460 = vunpack.c.l.b16 %v1227
    %v1461 = vunpack.c.l.b16 %v1228
    %v1462 = vunpack.c.l.b16 %v1229
    %v1463 = vunpack.c.l.b16 %v1230
    %v1464 = vpack.c.b16 %v1449, %v1448
    %v1465 = vpack.c.b16 %v1451, %v1450
    %v1466 = vpack.c.b16 %v1453, %v1452
    %v1467 = vpack.c.b16 %v1455, %v1454
    %v1468 = vpack.c.b16 %v1457, %v1456
    %v1469 = vpack.c.b16 %v1459, %v1458
    %v1470 = vpack.c.b16 %v1461, %v1460
    %v1471 = vpack.c.b16 %v1463, %v1462
    %1480 = vmatprep.subr.bf16.mxu0 0
    %1481 = vmatpush1.bf16.msra.mxu0 %v1464
    %1482 = vmatprep.subr.bf16.mxu0 0
    %1483 = vmatpush1.bf16.msra.mxu0 %v1465
    %1484 = vmatprep.subr.bf16.mxu0 0
    %1485 = vmatpush1.bf16.msra.mxu0 %v1466
    %1486 = vmatprep.subr.bf16.mxu0 0
    %1487 = vmatpush1.bf16.msra.mxu0 %v1467
    %1488 = vmatprep.subr.bf16.mxu0 0
    %1489 = vmatpush1.bf16.msra.mxu0 %v1468
    %1490 = vmatprep.subr.bf16.mxu0 0
    %1491 = vmatpush1.bf16.msra.mxu0 %v1469
    %1492 = vmatprep.subr.bf16.mxu0 0
    %1493 = vmatpush1.bf16.msra.mxu0 %v1470
    %1494 = vmatprep.subr.bf16.mxu0 0
    %1495 = vmatpush1.bf16.msra.mxu0 %v1471
    %1496 = vmatprep.subr.bf16.mxu0 0
    %1497 = vmatpush1.bf16.msra.mxu0 0
    %1498 = vmatprep.subr.bf16.mxu0 0
    %1499 = vmatpush1.bf16.msra.mxu0 0
    %1500 = vmatprep.subr.bf16.mxu0 0
    %1501 = vmatpush1.bf16.msra.mxu0 0
    %1502 = vmatprep.subr.bf16.mxu0 0
    %1503 = vmatpush1.bf16.msra.mxu0 0
    %1504 = vmatprep.subr.bf16.mxu0 0
    %1505 = vmatpush1.bf16.msra.mxu0 0
    %1506 = vmatprep.subr.bf16.mxu0 0
    %1507 = vmatpush1.bf16.msra.mxu0 0
    %1508 = vmatprep.subr.bf16.mxu0 0
    %1509 = vmatpush1.bf16.msra.mxu0 0
    %1510 = vmatprep.subr.bf16.mxu0 0
    %1511 = vmatpush1.bf16.msra.mxu0 0
    %1512 = vmatprep.mubr.bf16.mxu0 0
    %1513 = vmatmul.mubr.bf16.gmra.mrb[0].mxu0 %v1410
    %v1514 = vpop.f32.mrb[0].mxu0
    %v1515 = vadd.f32 %v1430, %v1514
    %v1516 = vpop.f32.mrb[0].mxu0
    %v1517 = vpop.f32.mrb[0].mxu0
    %v1518 = vadd.f32 %v1430, %v1517
    %v1519 = vpop.f32.mrb[0].mxu0
    %1520 = vmatprep.mubr.bf16.mxu0 0
    %1521 = vmatmul.mubr.bf16.gmra.mrb[0].mxu0 %v1411
    %v1522 = vpop.f32.mrb[0].mxu0
    %v1523 = vadd.f32 %v1430, %v1522
    %v1524 = vpop.f32.mrb[0].mxu0
    %v1525 = vpop.f32.mrb[0].mxu0
    %v1526 = vadd.f32 %v1430, %v1525
    %v1527 = vpop.f32.mrb[0].mxu0
    %1528 = vmatprep.mubr.bf16.mxu0 0
    %1529 = vmatmul.mubr.bf16.gmra.mrb[0].mxu0 %v1412
    %v1530 = vpop.f32.mrb[0].mxu0
    %v1531 = vadd.f32 %v1430, %v1530
    %v1532 = vpop.f32.mrb[0].mxu0
    %v1533 = vpop.f32.mrb[0].mxu0
    %v1534 = vadd.f32 %v1430, %v1533
    %v1535 = vpop.f32.mrb[0].mxu0
    %1536 = vmatprep.mubr.bf16.mxu0 0
    %1537 = vmatmul.mubr.bf16.gmra.mrb[0].mxu0 %v1413
    %v1538 = vpop.f32.mrb[0].mxu0
    %v1539 = vadd.f32 %v1430, %v1538
    %v1540 = vpop.f32.mrb[0].mxu0
    %v1541 = vpop.f32.mrb[0].mxu0
    %v1542 = vadd.f32 %v1430, %v1541
    %v1543 = vpop.f32.mrb[0].mxu0
    %1544 = vmatprep.mubr.bf16.mxu0 0
    %1545 = vmatmul.mubr.bf16.gmra.mrb[0].mxu0 %v1414
    %v1546 = vpop.f32.mrb[0].mxu0
    %v1547 = vadd.f32 %v1430, %v1546
    %v1548 = vpop.f32.mrb[0].mxu0
    %v1549 = vpop.f32.mrb[0].mxu0
    %v1550 = vadd.f32 %v1430, %v1549
    %v1551 = vpop.f32.mrb[0].mxu0
    %1552 = vmatprep.mubr.bf16.mxu0 0
    %1553 = vmatmul.mubr.bf16.gmra.mrb[0].mxu0 %v1415
    %v1554 = vpop.f32.mrb[0].mxu0
    %v1555 = vadd.f32 %v1430, %v1554
    %v1556 = vpop.f32.mrb[0].mxu0
    %v1557 = vpop.f32.mrb[0].mxu0
    %v1558 = vadd.f32 %v1430, %v1557
    %v1559 = vpop.f32.mrb[0].mxu0
    %1560 = vmatprep.mubr.bf16.mxu0 0
    %1561 = vmatmul.mubr.bf16.gmra.mrb[0].mxu0 %v1416
    %v1562 = vpop.f32.mrb[0].mxu0
    %v1563 = vadd.f32 %v1430, %v1562
    %v1564 = vpop.f32.mrb[0].mxu0
    %v1565 = vpop.f32.mrb[0].mxu0
    %v1566 = vadd.f32 %v1430, %v1565
    %v1567 = vpop.f32.mrb[0].mxu0
    %1568 = vmatprep.mubr.bf16.mxu0 0
    %1569 = vmatmul.mubr.bf16.gmra.mrb[0].mxu0 %v1417
    %v1570 = vpop.f32.mrb[0].mxu0
    %v1571 = vadd.f32 %v1430, %v1570
    %v1572 = vpop.f32.mrb[0].mxu0
    %v1573 = vpop.f32.mrb[0].mxu0
    %v1574 = vadd.f32 %v1430, %v1573
    %v1575 = vpop.f32.mrb[0].mxu0
    %1576 = vmatprep.mubr.bf16.mxu0 0
    %1577 = vmatmul.mubr.bf16.gmra.mrb[0].mxu0 %v1418
    %v1578 = vpop.f32.mrb[0].mxu0
    %v1579 = vadd.f32 %v1430, %v1578
    %v1580 = vpop.f32.mrb[0].mxu0
    %v1581 = vpop.f32.mrb[0].mxu0
    %v1582 = vadd.f32 %v1430, %v1581
    %v1583 = vpop.f32.mrb[0].mxu0
    %1584 = vmatprep.mubr.bf16.mxu0 0
    %1585 = vmatmul.mubr.bf16.gmra.mrb[0].mxu0 %v1419
    %v1586 = vpop.f32.mrb[0].mxu0
    %v1587 = vadd.f32 %v1430, %v1586
    %v1588 = vpop.f32.mrb[0].mxu0
    %v1589 = vpop.f32.mrb[0].mxu0
    %v1590 = vadd.f32 %v1430, %v1589
    %v1591 = vpop.f32.mrb[0].mxu0
    %1592 = vmatprep.mubr.bf16.mxu0 0
    %1593 = vmatmul.mubr.bf16.gmra.mrb[0].mxu0 %v1420
    %v1594 = vpop.f32.mrb[0].mxu0
    %v1595 = vadd.f32 %v1430, %v1594
    %v1596 = vpop.f32.mrb[0].mxu0
    %v1597 = vpop.f32.mrb[0].mxu0
    %v1598 = vadd.f32 %v1430, %v1597
    %v1599 = vpop.f32.mrb[0].mxu0
    %1600 = vmatprep.mubr.bf16.mxu0 0
    %1601 = vmatmul.mubr.bf16.gmra.mrb[0].mxu0 %v1421
    %v1602 = vpop.f32.mrb[0].mxu0
    %v1603 = vadd.f32 %v1430, %v1602
    %v1604 = vpop.f32.mrb[0].mxu0
    %v1605 = vpop.f32.mrb[0].mxu0
    %v1606 = vadd.f32 %v1430, %v1605
    %v1607 = vpop.f32.mrb[0].mxu0
    %1608 = vmatprep.mubr.bf16.mxu0 0
    %1609 = vmatmul.mubr.bf16.gmra.mrb[0].mxu0 %v1422
    %v1610 = vpop.f32.mrb[0].mxu0
    %v1611 = vadd.f32 %v1430, %v1610
    %v1612 = vpop.f32.mrb[0].mxu0
    %v1613 = vpop.f32.mrb[0].mxu0
    %v1614 = vadd.f32 %v1430, %v1613
    %v1615 = vpop.f32.mrb[0].mxu0
    %1616 = vmatprep.mubr.bf16.mxu0 0
    %1617 = vmatmul.mubr.bf16.gmra.mrb[0].mxu0 %v1423
    %v1618 = vpop.f32.mrb[0].mxu0
    %v1619 = vadd.f32 %v1430, %v1618
    %v1620 = vpop.f32.mrb[0].mxu0
    %v1621 = vpop.f32.mrb[0].mxu0
    %v1622 = vadd.f32 %v1430, %v1621
    %v1623 = vpop.f32.mrb[0].mxu0
    %1624 = vmatprep.mubr.bf16.mxu0 0
    %1625 = vmatmul.mubr.bf16.gmra.mrb[0].mxu0 %v1424
    %v1626 = vpop.f32.mrb[0].mxu0
    %v1627 = vadd.f32 %v1430, %v1626
    %v1628 = vpop.f32.mrb[0].mxu0
    %v1629 = vpop.f32.mrb[0].mxu0
    %v1630 = vadd.f32 %v1430, %v1629
    %v1631 = vpop.f32.mrb[0].mxu0
    %1632 = vmatprep.mubr.bf16.mxu0 0
    %1633 = vmatmul.mubr.bf16.gmra.mrb[0].mxu0 %v1425
    %v1634 = vpop.f32.mrb[0].mxu0
    %v1635 = vadd.f32 %v1430, %v1634
    %v1636 = vpop.f32.mrb[0].mxu0
    %v1637 = vpop.f32.mrb[0].mxu0
    %v1638 = vadd.f32 %v1430, %v1637
    %v1639 = vpop.f32.mrb[0].mxu0
    %1640 = vdwg.mxu0
    %v1641 = vmax.f32 %v1515, 0.0
    %v1642 = vmax.f32 %v1518, 0.0
    %v1643 = vmax.f32 %v1523, 0.0
    %v1644 = vmax.f32 %v1526, 0.0
    %v1645 = vmax.f32 %v1531, 0.0
    %v1646 = vmax.f32 %v1534, 0.0
    %v1647 = vmax.f32 %v1539, 0.0
    %v1648 = vmax.f32 %v1542, 0.0
    %v1649 = vmax.f32 %v1547, 0.0
    %v1650 = vmax.f32 %v1550, 0.0
    %v1651 = vmax.f32 %v1555, 0.0
    %v1652 = vmax.f32 %v1558, 0.0
    %v1653 = vmax.f32 %v1563, 0.0
    %v1654 = vmax.f32 %v1566, 0.0
    %v1655 = vmax.f32 %v1571, 0.0
    %v1656 = vmax.f32 %v1574, 0.0
    %v1657 = vmax.f32 %v1579, 0.0
    %v1658 = vmax.f32 %v1582, 0.0
    %v1659 = vmax.f32 %v1587, 0.0
    %v1660 = vmax.f32 %v1590, 0.0
    %v1661 = vmax.f32 %v1595, 0.0
    %v1662 = vmax.f32 %v1598, 0.0
    %v1663 = vmax.f32 %v1603, 0.0
    %v1664 = vmax.f32 %v1606, 0.0
    %v1665 = vmax.f32 %v1611, 0.0
    %v1666 = vmax.f32 %v1614, 0.0
    %v1667 = vmax.f32 %v1619, 0.0
    %v1668 = vmax.f32 %v1622, 0.0
    %v1669 = vmax.f32 %v1627, 0.0
    %v1670 = vmax.f32 %v1630, 0.0
    %v1671 = vmax.f32 %v1635, 0.0
    %v1672 = vmax.f32 %v1638, 0.0
    %v1673 = vpack.c.bf16 %v1642, %v1641
    %v1674 = vpack.c.bf16 %v1644, %v1643
    %v1675 = vpack.c.bf16 %v1646, %v1645
    %v1676 = vpack.c.bf16 %v1648, %v1647
    %v1677 = vpack.c.bf16 %v1650, %v1649
    %v1678 = vpack.c.bf16 %v1652, %v1651
    %v1679 = vpack.c.bf16 %v1654, %v1653
    %v1680 = vpack.c.bf16 %v1656, %v1655
    %v1681 = vpack.c.bf16 %v1658, %v1657
    %v1682 = vpack.c.bf16 %v1660, %v1659
    %v1683 = vpack.c.bf16 %v1662, %v1661
    %v1684 = vpack.c.bf16 %v1664, %v1663
    %v1685 = vpack.c.bf16 %v1666, %v1665
    %v1686 = vpack.c.bf16 %v1668, %v1667
    %v1687 = vpack.c.bf16 %v1670, %v1669
    %v1688 = vpack.c.bf16 %v1672, %v1671
    %v1690 = vlaneseq
    %v1691 = vshrl.u32 %v1690, 7
    %v1692 = vsub.s32 0, %v1691
    %v1693 = vrot.slane %v1248, %v1692
    %v1711 = vunpack.c.l.b16 %v1232
    %v1712 = vunpack.c.l.b16 %v1233
    %v1713 = vunpack.c.l.b16 %v1234
    %v1714 = vunpack.c.l.b16 %v1235
    %v1715 = vunpack.c.l.b16 %v1236
    %v1716 = vunpack.c.l.b16 %v1237
    %v1717 = vunpack.c.l.b16 %v1238
    %v1718 = vunpack.c.l.b16 %v1239
    %v1719 = vunpack.c.l.b16 %v1240
    %v1720 = vunpack.c.l.b16 %v1241
    %v1721 = vunpack.c.l.b16 %v1242
    %v1722 = vunpack.c.l.b16 %v1243
    %v1723 = vunpack.c.l.b16 %v1244
    %v1724 = vunpack.c.l.b16 %v1245
    %v1725 = vunpack.c.l.b16 %v1246
    %v1726 = vunpack.c.l.b16 %v1247
    %v1727 = vpack.c.b16 %v1712, %v1711
    %v1728 = vpack.c.b16 %v1714, %v1713
    %v1729 = vpack.c.b16 %v1716, %v1715
    %v1730 = vpack.c.b16 %v1718, %v1717
    %v1731 = vpack.c.b16 %v1720, %v1719
    %v1732 = vpack.c.b16 %v1722, %v1721
    %v1733 = vpack.c.b16 %v1724, %v1723
    %v1734 = vpack.c.b16 %v1726, %v1725
    %1743 = vmatprep.subr.bf16.mxu0 0
    %1744 = vmatpush1.bf16.msra.mxu0 %v1727
    %1745 = vmatprep.subr.bf16.mxu0 0
    %1746 = vmatpush1.bf16.msra.mxu0 %v1728
    %1747 = vmatprep.subr.bf16.mxu0 0
    %1748 = vmatpush1.bf16.msra.mxu0 %v1729
    %1749 = vmatprep.subr.bf16.mxu0 0
    %1750 = vmatpush1.bf16.msra.mxu0 %v1730
    %1751 = vmatprep.subr.bf16.mxu0 0
    %1752 = vmatpush1.bf16.msra.mxu0 %v1731
    %1753 = vmatprep.subr.bf16.mxu0 0
    %1754 = vmatpush1.bf16.msra.mxu0 %v1732
    %1755 = vmatprep.subr.bf16.mxu0 0
    %1756 = vmatpush1.bf16.msra.mxu0 %v1733
    %1757 = vmatprep.subr.bf16.mxu0 0
    %1758 = vmatpush1.bf16.msra.mxu0 %v1734
    %1759 = vmatprep.subr.bf16.mxu0 0
    %1760 = vmatpush1.bf16.msra.mxu0 0
    %1761 = vmatprep.subr.bf16.mxu0 0
    %1762 = vmatpush1.bf16.msra.mxu0 0
    %1763 = vmatprep.subr.bf16.mxu0 0
    %1764 = vmatpush1.bf16.msra.mxu0 0
    %1765 = vmatprep.subr.bf16.mxu0 0
    %1766 = vmatpush1.bf16.msra.mxu0 0
    %1767 = vmatprep.subr.bf16.mxu0 0
    %1768 = vmatpush1.bf16.msra.mxu0 0
    %1769 = vmatprep.subr.bf16.mxu0 0
    %1770 = vmatpush1.bf16.msra.mxu0 0
    %1771 = vmatprep.subr.bf16.mxu0 0
    %1772 = vmatpush1.bf16.msra.mxu0 0
    %1773 = vmatprep.subr.bf16.mxu0 0
    %1774 = vmatpush1.bf16.msra.mxu0 0
    %1775 = vmatprep.mubr.bf16.mxu0 0
    %1776 = vmatmul.mubr.bf16.gmra.mrb[0].mxu0 %v1673
    %v1777 = vpop.f32.mrb[0].mxu0
    %v1778 = vadd.f32 %v1693, %v1777
    %v1779 = vpop.f32.mrb[0].mxu0
    %v1780 = vpop.f32.mrb[0].mxu0
    %v1781 = vadd.f32 %v1693, %v1780
    %v1782 = vpop.f32.mrb[0].mxu0
    %1783 = vmatprep.mubr.bf16.mxu0 0
    %1784 = vmatmul.mubr.bf16.gmra.mrb[0].mxu0 %v1674
    %v1785 = vpop.f32.mrb[0].mxu0
    %v1786 = vadd.f32 %v1693, %v1785
    %v1787 = vpop.f32.mrb[0].mxu0
    %v1788 = vpop.f32.mrb[0].mxu0
    %v1789 = vadd.f32 %v1693, %v1788
    %v1790 = vpop.f32.mrb[0].mxu0
    %1791 = vmatprep.mubr.bf16.mxu0 0
    %1792 = vmatmul.mubr.bf16.gmra.mrb[0].mxu0 %v1675
    %v1793 = vpop.f32.mrb[0].mxu0
    %v1794 = vadd.f32 %v1693, %v1793
    %v1795 = vpop.f32.mrb[0].mxu0
    %v1796 = vpop.f32.mrb[0].mxu0
    %v1797 = vadd.f32 %v1693, %v1796
    %v1798 = vpop.f32.mrb[0].mxu0
    %1799 = vmatprep.mubr.bf16.mxu0 0
    %1800 = vmatmul.mubr.bf16.gmra.mrb[0].mxu0 %v1676
    %v1801 = vpop.f32.mrb[0].mxu0
    %v1802 = vadd.f32 %v1693, %v1801
    %v1803 = vpop.f32.mrb[0].mxu0
    %v1804 = vpop.f32.mrb[0].mxu0
    %v1805 = vadd.f32 %v1693, %v1804
    %v1806 = vpop.f32.mrb[0].mxu0
    %1807 = vmatprep.mubr.bf16.mxu0 0
    %1808 = vmatmul.mubr.bf16.gmra.mrb[0].mxu0 %v1677
    %v1809 = vpop.f32.mrb[0].mxu0
    %v1810 = vadd.f32 %v1693, %v1809
    %v1811 = vpop.f32.mrb[0].mxu0
    %v1812 = vpop.f32.mrb[0].mxu0
    %v1813 = vadd.f32 %v1693, %v1812
    %v1814 = vpop.f32.mrb[0].mxu0
    %1815 = vmatprep.mubr.bf16.mxu0 0
    %1816 = vmatmul.mubr.bf16.gmra.mrb[0].mxu0 %v1678
    %v1817 = vpop.f32.mrb[0].mxu0
    %v1818 = vadd.f32 %v1693, %v1817
    %v1819 = vpop.f32.mrb[0].mxu0
    %v1820 = vpop.f32.mrb[0].mxu0
    %v1821 = vadd.f32 %v1693, %v1820
    %v1822 = vpop.f32.mrb[0].mxu0
    %1823 = vmatprep.mubr.bf16.mxu0 0
    %1824 = vmatmul.mubr.bf16.gmra.mrb[0].mxu0 %v1679
    %v1825 = vpop.f32.mrb[0].mxu0
    %v1826 = vadd.f32 %v1693, %v1825
    %v1827 = vpop.f32.mrb[0].mxu0
    %v1828 = vpop.f32.mrb[0].mxu0
    %v1829 = vadd.f32 %v1693, %v1828
    %v1830 = vpop.f32.mrb[0].mxu0
    %1831 = vmatprep.mubr.bf16.mxu0 0
    %1832 = vmatmul.mubr.bf16.gmra.mrb[0].mxu0 %v1680
    %v1833 = vpop.f32.mrb[0].mxu0
    %v1834 = vadd.f32 %v1693, %v1833
    %v1835 = vpop.f32.mrb[0].mxu0
    %v1836 = vpop.f32.mrb[0].mxu0
    %v1837 = vadd.f32 %v1693, %v1836
    %v1838 = vpop.f32.mrb[0].mxu0
    %1839 = vmatprep.mubr.bf16.mxu0 0
    %1840 = vmatmul.mubr.bf16.gmra.mrb[0].mxu0 %v1681
    %v1841 = vpop.f32.mrb[0].mxu0
    %v1842 = vadd.f32 %v1693, %v1841
    %v1843 = vpop.f32.mrb[0].mxu0
    %v1844 = vpop.f32.mrb[0].mxu0
    %v1845 = vadd.f32 %v1693, %v1844
    %v1846 = vpop.f32.mrb[0].mxu0
    %1847 = vmatprep.mubr.bf16.mxu0 0
    %1848 = vmatmul.mubr.bf16.gmra.mrb[0].mxu0 %v1682
    %v1849 = vpop.f32.mrb[0].mxu0
    %v1850 = vadd.f32 %v1693, %v1849
    %v1851 = vpop.f32.mrb[0].mxu0
    %v1852 = vpop.f32.mrb[0].mxu0
    %v1853 = vadd.f32 %v1693, %v1852
    %v1854 = vpop.f32.mrb[0].mxu0
    %1855 = vmatprep.mubr.bf16.mxu0 0
    %1856 = vmatmul.mubr.bf16.gmra.mrb[0].mxu0 %v1683
    %v1857 = vpop.f32.mrb[0].mxu0
    %v1858 = vadd.f32 %v1693, %v1857
    %v1859 = vpop.f32.mrb[0].mxu0
    %v1860 = vpop.f32.mrb[0].mxu0
    %v1861 = vadd.f32 %v1693, %v1860
    %v1862 = vpop.f32.mrb[0].mxu0
    %1863 = vmatprep.mubr.bf16.mxu0 0
    %1864 = vmatmul.mubr.bf16.gmra.mrb[0].mxu0 %v1684
    %v1865 = vpop.f32.mrb[0].mxu0
    %v1866 = vadd.f32 %v1693, %v1865
    %v1867 = vpop.f32.mrb[0].mxu0
    %v1868 = vpop.f32.mrb[0].mxu0
    %v1869 = vadd.f32 %v1693, %v1868
    %v1870 = vpop.f32.mrb[0].mxu0
    %1871 = vmatprep.mubr.bf16.mxu0 0
    %1872 = vmatmul.mubr.bf16.gmra.mrb[0].mxu0 %v1685
    %v1873 = vpop.f32.mrb[0].mxu0
    %v1874 = vadd.f32 %v1693, %v1873
    %v1875 = vpop.f32.mrb[0].mxu0
    %v1876 = vpop.f32.mrb[0].mxu0
    %v1877 = vadd.f32 %v1693, %v1876
    %v1878 = vpop.f32.mrb[0].mxu0
    %1879 = vmatprep.mubr.bf16.mxu0 0
    %1880 = vmatmul.mubr.bf16.gmra.mrb[0].mxu0 %v1686
    %v1881 = vpop.f32.mrb[0].mxu0
    %v1882 = vadd.f32 %v1693, %v1881
    %v1883 = vpop.f32.mrb[0].mxu0
    %v1884 = vpop.f32.mrb[0].mxu0
    %v1885 = vadd.f32 %v1693, %v1884
    %v1886 = vpop.f32.mrb[0].mxu0
    %1887 = vmatprep.mubr.bf16.mxu0 0
    %1888 = vmatmul.mubr.bf16.gmra.mrb[0].mxu0 %v1687
    %v1889 = vpop.f32.mrb[0].mxu0
    %v1890 = vadd.f32 %v1693, %v1889
    %v1891 = vpop.f32.mrb[0].mxu0
    %v1892 = vpop.f32.mrb[0].mxu0
    %v1893 = vadd.f32 %v1693, %v1892
    %v1894 = vpop.f32.mrb[0].mxu0
    %1895 = vmatprep.mubr.bf16.mxu0 0
    %1896 = vmatmul.mubr.bf16.gmra.mrb[0].mxu0 %v1688
    %v1897 = vpop.f32.mrb[0].mxu0
    %v1898 = vadd.f32 %v1693, %v1897
    %v1899 = vpop.f32.mrb[0].mxu0
    %v1900 = vpop.f32.mrb[0].mxu0
    %v1901 = vadd.f32 %v1693, %v1900
    %v1902 = vpop.f32.mrb[0].mxu0
    %1903 = vdwg.mxu0
    %v1904 = vmax.f32 %v1778, 0.0
    %v1905 = vmax.f32 %v1781, 0.0
    %v1906 = vmax.f32 %v1786, 0.0
    %v1907 = vmax.f32 %v1789, 0.0
    %v1908 = vmax.f32 %v1794, 0.0
    %v1909 = vmax.f32 %v1797, 0.0
    %v1910 = vmax.f32 %v1802, 0.0
    %v1911 = vmax.f32 %v1805, 0.0
    %v1912 = vmax.f32 %v1810, 0.0
    %v1913 = vmax.f32 %v1813, 0.0
    %v1914 = vmax.f32 %v1818, 0.0
    %v1915 = vmax.f32 %v1821, 0.0
    %v1916 = vmax.f32 %v1826, 0.0
    %v1917 = vmax.f32 %v1829, 0.0
    %v1918 = vmax.f32 %v1834, 0.0
    %v1919 = vmax.f32 %v1837, 0.0
    %v1920 = vmax.f32 %v1842, 0.0
    %v1921 = vmax.f32 %v1845, 0.0
    %v1922 = vmax.f32 %v1850, 0.0
    %v1923 = vmax.f32 %v1853, 0.0
    %v1924 = vmax.f32 %v1858, 0.0
    %v1925 = vmax.f32 %v1861, 0.0
    %v1926 = vmax.f32 %v1866, 0.0
    %v1927 = vmax.f32 %v1869, 0.0
    %v1928 = vmax.f32 %v1874, 0.0
    %v1929 = vmax.f32 %v1877, 0.0
    %v1930 = vmax.f32 %v1882, 0.0
    %v1931 = vmax.f32 %v1885, 0.0
    %v1932 = vmax.f32 %v1890, 0.0
    %v1933 = vmax.f32 %v1893, 0.0
    %v1934 = vmax.f32 %v1898, 0.0
    %v1935 = vmax.f32 %v1901, 0.0
    %v1936 = vpack.c.bf16 %v1905, %v1904
    %v1937 = vpack.c.bf16 %v1907, %v1906
    %v1938 = vpack.c.bf16 %v1909, %v1908
    %v1939 = vpack.c.bf16 %v1911, %v1910
    %v1940 = vpack.c.bf16 %v1913, %v1912
    %v1941 = vpack.c.bf16 %v1915, %v1914
    %v1942 = vpack.c.bf16 %v1917, %v1916
    %v1943 = vpack.c.bf16 %v1919, %v1918
    %v1944 = vpack.c.bf16 %v1921, %v1920
    %v1945 = vpack.c.bf16 %v1923, %v1922
    %v1946 = vpack.c.bf16 %v1925, %v1924
    %v1947 = vpack.c.bf16 %v1927, %v1926
    %v1948 = vpack.c.bf16 %v1929, %v1928
    %v1949 = vpack.c.bf16 %v1931, %v1930
    %v1950 = vpack.c.bf16 %v1933, %v1932
    %v1951 = vpack.c.bf16 %v1935, %v1934
    %v1952 = vld [vmem:[#allocation13] sm:$0xf]
    %v1953 = vld [vmem:[#allocation13 + $0x4] sm:$0xf]
    %v1954 = vld [vmem:[#allocation13 + $0x8] sm:$0xf]
    %v1955 = vld [vmem:[#allocation13 + $0xc] sm:$0xf]
    %v1956 = vld [vmem:[#allocation13 + $0x10] sm:$0xf]
    %v1957 = vld [vmem:[#allocation13 + $0x14] sm:$0xf]
    %v1958 = vld [vmem:[#allocation13 + $0x18] sm:$0xf]
    %v1959 = vld [vmem:[#allocation13 + $0x1c] sm:$0xf]
    %v1960 = vld [vmem:[#allocation13 + $0x20] sm:$0xf]
    %v1961 = vld [vmem:[#allocation13 + $0x24] sm:$0xf]
    %v1962 = vld [vmem:[#allocation13 + $0x28] sm:$0xf]
    %v1963 = vld [vmem:[#allocation13 + $0x2c] sm:$0xf]
    %v1964 = vld [vmem:[#allocation13 + $0x30] sm:$0xf]
    %v1965 = vld [vmem:[#allocation13 + $0x34] sm:$0xf]
    %v1966 = vld [vmem:[#allocation13 + $0x38] sm:$0xf]
    %v1967 = vld [vmem:[#allocation13 + $0x3c] sm:$0xf]
    %v1968 = vld [vmem:[%s11] sm:$0x1]
    %v1969 = vld [vmem:[#allocation14] sm:$0xf]
    %v1970 = vld [vmem:[#allocation14 + $0x4] sm:$0xf]
    %v1971 = vld [vmem:[#allocation14 + $0x8] sm:$0xf]
    %v1972 = vld [vmem:[#allocation14 + $0xc] sm:$0xf]
    %v1973 = vld [vmem:[#allocation14 + $0x10] sm:$0xf]
    %v1974 = vld [vmem:[#allocation14 + $0x14] sm:$0xf]
    %v1975 = vld [vmem:[#allocation14 + $0x18] sm:$0xf]
    %v1976 = vld [vmem:[#allocation14 + $0x1c] sm:$0xf]
    %v1977 = vld [vmem:[#allocation14 + $0x20] sm:$0xf]
    %v1978 = vld [vmem:[#allocation14 + $0x24] sm:$0xf]
    %v1979 = vld [vmem:[#allocation14 + $0x28] sm:$0xf]
    %v1980 = vld [vmem:[#allocation14 + $0x2c] sm:$0xf]
    %v1981 = vld [vmem:[#allocation14 + $0x30] sm:$0xf]
    %v1982 = vld [vmem:[#allocation14 + $0x34] sm:$0xf]
    %v1983 = vld [vmem:[#allocation14 + $0x38] sm:$0xf]
    %v1984 = vld [vmem:[#allocation14 + $0x3c] sm:$0xf]
    %v1985 = vld [vmem:[%s13] sm:$0x1]
    %1986 = vmatprep.subr.bf16.mxu0 0
    %1987 = vmatpush1.bf16.msra.mxu0 %v1936
    %1988 = vmatprep.subr.bf16.mxu0 0
    %1989 = vmatpush1.bf16.msra.mxu0 %v1937
    %1990 = vmatprep.subr.bf16.mxu0 0
    %1991 = vmatpush1.bf16.msra.mxu0 %v1938
    %1992 = vmatprep.subr.bf16.mxu0 0
    %1993 = vmatpush1.bf16.msra.mxu0 %v1939
    %1994 = vmatprep.subr.bf16.mxu0 0
    %1995 = vmatpush1.bf16.msra.mxu0 %v1940
    %1996 = vmatprep.subr.bf16.mxu0 0
    %1997 = vmatpush1.bf16.msra.mxu0 %v1941
    %1998 = vmatprep.subr.bf16.mxu0 0
    %1999 = vmatpush1.bf16.msra.mxu0 %v1942
    %2000 = vmatprep.subr.bf16.mxu0 0
    %2001 = vmatpush1.bf16.msra.mxu0 %v1943
    %2002 = vmatprep.subr.bf16.mxu0 0
    %2003 = vmatpush1.bf16.msra.mxu0 %v1944
    %2004 = vmatprep.subr.bf16.mxu0 0
    %2005 = vmatpush1.bf16.msra.mxu0 %v1945
    %2006 = vmatprep.subr.bf16.mxu0 0
    %2007 = vmatpush1.bf16.msra.mxu0 %v1946
    %2008 = vmatprep.subr.bf16.mxu0 0
    %2009 = vmatpush1.bf16.msra.mxu0 %v1947
    %2010 = vmatprep.subr.bf16.mxu0 0
    %2011 = vmatpush1.bf16.msra.mxu0 %v1948
    %2012 = vmatprep.subr.bf16.mxu0 0
    %2013 = vmatpush1.bf16.msra.mxu0 %v1949
    %2014 = vmatprep.subr.bf16.mxu0 0
    %2015 = vmatpush1.bf16.msra.mxu0 %v1950
    %2016 = vmatprep.subr.bf16.mxu0 0
    %2017 = vmatpush1.bf16.msra.mxu0 %v1951
    %2018 = vmatprep.mubr.bf16.mxu0 %v353
    %2019 = vmatmul.mubr.bf16.gmra.mrb[0].mxu0 %v352
    %v2020 = vpop.f32.mrb[0].mxu0
    %v2021 = vadd.f32 0.0, %v2020
    %v2022 = vpop.f32.mrb[0].mxu0
    %v2023 = vpop.f32.mrb[0].mxu0
    %v2024 = vadd.f32 0.0, %v2023
    %v2025 = vpop.f32.mrb[0].mxu0
    %2026 = vmatprep.mubr.bf16.mxu0 %v355
    %2027 = vmatmul.mubr.bf16.gmra.mrb[0].mxu0 %v354
    %v2028 = vpop.f32.mrb[0].mxu0
    %v2029 = vadd.f32 0.0, %v2028
    %v2030 = vpop.f32.mrb[0].mxu0
    %v2031 = vpop.f32.mrb[0].mxu0
    %v2032 = vadd.f32 0.0, %v2031
    %v2033 = vpop.f32.mrb[0].mxu0
    %2034 = vmatprep.mubr.bf16.mxu0 %v357
    %2035 = vmatmul.mubr.bf16.gmra.mrb[0].mxu0 %v356
    %v2036 = vpop.f32.mrb[0].mxu0
    %v2037 = vadd.f32 0.0, %v2036
    %v2038 = vpop.f32.mrb[0].mxu0
    %v2039 = vpop.f32.mrb[0].mxu0
    %v2040 = vadd.f32 0.0, %v2039
    %v2041 = vpop.f32.mrb[0].mxu0
    %2042 = vmatprep.mubr.bf16.mxu0 %v359
    %2043 = vmatmul.mubr.bf16.gmra.mrb[0].mxu0 %v358
    %v2044 = vpop.f32.mrb[0].mxu0
    %v2045 = vadd.f32 0.0, %v2044
    %v2046 = vpop.f32.mrb[0].mxu0
    %v2047 = vpop.f32.mrb[0].mxu0
    %v2048 = vadd.f32 0.0, %v2047
    %v2049 = vpop.f32.mrb[0].mxu0
    %2050 = vmatprep.mubr.bf16.mxu0 %v361
    %2051 = vmatmul.mubr.bf16.gmra.mrb[0].mxu0 %v360
    %v2052 = vpop.f32.mrb[0].mxu0
    %v2053 = vadd.f32 0.0, %v2052
    %v2054 = vpop.f32.mrb[0].mxu0
    %v2055 = vpop.f32.mrb[0].mxu0
    %v2056 = vadd.f32 0.0, %v2055
    %v2057 = vpop.f32.mrb[0].mxu0
    %2058 = vmatprep.mubr.bf16.mxu0 %v363
    %2059 = vmatmul.mubr.bf16.gmra.mrb[0].mxu0 %v362
    %v2060 = vpop.f32.mrb[0].mxu0
    %v2061 = vadd.f32 0.0, %v2060
    %v2062 = vpop.f32.mrb[0].mxu0
    %v2063 = vpop.f32.mrb[0].mxu0
    %v2064 = vadd.f32 0.0, %v2063
    %v2065 = vpop.f32.mrb[0].mxu0
    %2066 = vmatprep.mubr.bf16.mxu0 %v365
    %2067 = vmatmul.mubr.bf16.gmra.mrb[0].mxu0 %v364
    %v2068 = vpop.f32.mrb[0].mxu0
    %v2069 = vadd.f32 0.0, %v2068
    %v2070 = vpop.f32.mrb[0].mxu0
    %v2071 = vpop.f32.mrb[0].mxu0
    %v2072 = vadd.f32 0.0, %v2071
    %v2073 = vpop.f32.mrb[0].mxu0
    %2074 = vmatprep.mubr.bf16.mxu0 %v367
    %2075 = vmatmul.mubr.bf16.gmra.mrb[0].mxu0 %v366
    %v2076 = vpop.f32.mrb[0].mxu0
    %v2077 = vadd.f32 0.0, %v2076
    %v2078 = vpop.f32.mrb[0].mxu0
    %v2079 = vpop.f32.mrb[0].mxu0
    %v2080 = vadd.f32 0.0, %v2079
    %v2081 = vpop.f32.mrb[0].mxu0
    %2082 = vmatprep.mubr.bf16.mxu0 %v369
    %2083 = vmatmul.mubr.bf16.gmra.mrb[0].mxu0 %v368
    %v2084 = vpop.f32.mrb[0].mxu0
    %v2085 = vadd.f32 0.0, %v2084
    %v2086 = vpop.f32.mrb[0].mxu0
    %v2087 = vpop.f32.mrb[0].mxu0
    %v2088 = vadd.f32 0.0, %v2087
    %v2089 = vpop.f32.mrb[0].mxu0
    %2090 = vmatprep.mubr.bf16.mxu0 %v371
    %2091 = vmatmul.mubr.bf16.gmra.mrb[0].mxu0 %v370
    %v2092 = vpop.f32.mrb[0].mxu0
    %v2093 = vadd.f32 0.0, %v2092
    %v2094 = vpop.f32.mrb[0].mxu0
    %v2095 = vpop.f32.mrb[0].mxu0
    %v2096 = vadd.f32 0.0, %v2095
    %v2097 = vpop.f32.mrb[0].mxu0
    %2098 = vmatprep.mubr.bf16.mxu0 %v373
    %2099 = vmatmul.mubr.bf16.gmra.mrb[0].mxu0 %v372
    %v2100 = vpop.f32.mrb[0].mxu0
    %v2101 = vadd.f32 0.0, %v2100
    %v2102 = vpop.f32.mrb[0].mxu0
    %v2103 = vpop.f32.mrb[0].mxu0
    %v2104 = vadd.f32 0.0, %v2103
    %v2105 = vpop.f32.mrb[0].mxu0
    %2106 = vmatprep.mubr.bf16.mxu0 %v375
    %2107 = vmatmul.mubr.bf16.gmra.mrb[0].mxu0 %v374
    %v2108 = vpop.f32.mrb[0].mxu0
    %v2109 = vadd.f32 0.0, %v2108
    %v2110 = vpop.f32.mrb[0].mxu0
    %v2111 = vpop.f32.mrb[0].mxu0
    %v2112 = vadd.f32 0.0, %v2111
    %v2113 = vpop.f32.mrb[0].mxu0
    %2114 = vmatprep.mubr.bf16.mxu0 %v377
    %2115 = vmatmul.mubr.bf16.gmra.mrb[0].mxu0 %v376
    %v2116 = vpop.f32.mrb[0].mxu0
    %v2117 = vadd.f32 0.0, %v2116
    %v2118 = vpop.f32.mrb[0].mxu0
    %v2119 = vpop.f32.mrb[0].mxu0
    %v2120 = vadd.f32 0.0, %v2119
    %v2121 = vpop.f32.mrb[0].mxu0
    %2122 = vmatprep.mubr.bf16.mxu0 %v379
    %2123 = vmatmul.mubr.bf16.gmra.mrb[0].mxu0 %v378
    %v2124 = vpop.f32.mrb[0].mxu0
    %v2125 = vadd.f32 0.0, %v2124
    %v2126 = vpop.f32.mrb[0].mxu0
    %v2127 = vpop.f32.mrb[0].mxu0
    %v2128 = vadd.f32 0.0, %v2127
    %v2129 = vpop.f32.mrb[0].mxu0
    %2130 = vmatprep.mubr.bf16.mxu0 %v381
    %2131 = vmatmul.mubr.bf16.gmra.mrb[0].mxu0 %v380
    %v2132 = vpop.f32.mrb[0].mxu0
    %v2133 = vadd.f32 0.0, %v2132
    %v2134 = vpop.f32.mrb[0].mxu0
    %v2135 = vpop.f32.mrb[0].mxu0
    %v2136 = vadd.f32 0.0, %v2135
    %v2137 = vpop.f32.mrb[0].mxu0
    %2138 = vmatprep.mubr.bf16.mxu0 %v383
    %2139 = vmatmul.mubr.bf16.gmra.mrb[0].mxu0 %v382
    %v2140 = vpop.f32.mrb[0].mxu0
    %v2141 = vadd.f32 0.0, %v2140
    %v2142 = vpop.f32.mrb[0].mxu0
    %v2143 = vpop.f32.mrb[0].mxu0
    %v2144 = vadd.f32 0.0, %v2143
    %v2145 = vpop.f32.mrb[0].mxu0
    %2146 = vdwg.mxu0
    %v2147 = vpack.c.bf16 %v2024, %v2021
    %v2148 = vpack.c.bf16 %v2032, %v2029
    %v2149 = vpack.c.bf16 %v2040, %v2037
    %v2150 = vpack.c.bf16 %v2048, %v2045
    %v2151 = vpack.c.bf16 %v2056, %v2053
    %v2152 = vpack.c.bf16 %v2064, %v2061
    %v2153 = vpack.c.bf16 %v2072, %v2069
    %v2154 = vpack.c.bf16 %v2080, %v2077
    %v2155 = vpack.c.bf16 %v2088, %v2085
    %v2156 = vpack.c.bf16 %v2096, %v2093
    %v2157 = vpack.c.bf16 %v2104, %v2101
    %v2158 = vpack.c.bf16 %v2112, %v2109
    %v2159 = vpack.c.bf16 %v2120, %v2117
    %v2160 = vpack.c.bf16 %v2128, %v2125
    %v2161 = vpack.c.bf16 %v2136, %v2133
    %v2162 = vpack.c.bf16 %v2144, %v2141
    %v2164 = vlaneseq
    %v2165 = vshrl.u32 %v2164, 7
    %v2166 = vsub.s32 0, %v2165
    %v2167 = vrot.slane %v1968, %v2166
    %v2185 = vunpack.c.l.b16 %v1952
    %v2186 = vunpack.c.l.b16 %v1953
    %v2187 = vunpack.c.l.b16 %v1954
    %v2188 = vunpack.c.l.b16 %v1955
    %v2189 = vunpack.c.l.b16 %v1956
    %v2190 = vunpack.c.l.b16 %v1957
    %v2191 = vunpack.c.l.b16 %v1958
    %v2192 = vunpack.c.l.b16 %v1959
    %v2193 = vunpack.c.l.b16 %v1960
    %v2194 = vunpack.c.l.b16 %v1961
    %v2195 = vunpack.c.l.b16 %v1962
    %v2196 = vunpack.c.l.b16 %v1963
    %v2197 = vunpack.c.l.b16 %v1964
    %v2198 = vunpack.c.l.b16 %v1965
    %v2199 = vunpack.c.l.b16 %v1966
    %v2200 = vunpack.c.l.b16 %v1967
    %v2201 = vpack.c.b16 %v2186, %v2185
    %v2202 = vpack.c.b16 %v2188, %v2187
    %v2203 = vpack.c.b16 %v2190, %v2189
    %v2204 = vpack.c.b16 %v2192, %v2191
    %v2205 = vpack.c.b16 %v2194, %v2193
    %v2206 = vpack.c.b16 %v2196, %v2195
    %v2207 = vpack.c.b16 %v2198, %v2197
    %v2208 = vpack.c.b16 %v2200, %v2199
    %2217 = vmatprep.subr.bf16.mxu0 0
    %2218 = vmatpush1.bf16.msra.mxu0 %v2201
    %2219 = vmatprep.subr.bf16.mxu0 0
    %2220 = vmatpush1.bf16.msra.mxu0 %v2202
    %2221 = vmatprep.subr.bf16.mxu0 0
    %2222 = vmatpush1.bf16.msra.mxu0 %v2203
    %2223 = vmatprep.subr.bf16.mxu0 0
    %2224 = vmatpush1.bf16.msra.mxu0 %v2204
    %2225 = vmatprep.subr.bf16.mxu0 0
    %2226 = vmatpush1.bf16.msra.mxu0 %v2205
    %2227 = vmatprep.subr.bf16.mxu0 0
    %2228 = vmatpush1.bf16.msra.mxu0 %v2206
    %2229 = vmatprep.subr.bf16.mxu0 0
    %2230 = vmatpush1.bf16.msra.mxu0 %v2207
    %2231 = vmatprep.subr.bf16.mxu0 0
    %2232 = vmatpush1.bf16.msra.mxu0 %v2208
    %2233 = vmatprep.subr.bf16.mxu0 0
    %2234 = vmatpush1.bf16.msra.mxu0 0
    %2235 = vmatprep.subr.bf16.mxu0 0
    %2236 = vmatpush1.bf16.msra.mxu0 0
    %2237 = vmatprep.subr.bf16.mxu0 0
    %2238 = vmatpush1.bf16.msra.mxu0 0
    %2239 = vmatprep.subr.bf16.mxu0 0
    %2240 = vmatpush1.bf16.msra.mxu0 0
    %2241 = vmatprep.subr.bf16.mxu0 0
    %2242 = vmatpush1.bf16.msra.mxu0 0
    %2243 = vmatprep.subr.bf16.mxu0 0
    %2244 = vmatpush1.bf16.msra.mxu0 0
    %2245 = vmatprep.subr.bf16.mxu0 0
    %2246 = vmatpush1.bf16.msra.mxu0 0
    %2247 = vmatprep.subr.bf16.mxu0 0
    %2248 = vmatpush1.bf16.msra.mxu0 0
    %2249 = vmatprep.mubr.bf16.mxu0 0
    %2250 = vmatmul.mubr.bf16.gmra.mrb[0].mxu0 %v2147
    %v2251 = vpop.f32.mrb[0].mxu0
    %v2252 = vadd.f32 %v2167, %v2251
    %v2253 = vpop.f32.mrb[0].mxu0
    %v2254 = vpop.f32.mrb[0].mxu0
    %v2255 = vadd.f32 %v2167, %v2254
    %v2256 = vpop.f32.mrb[0].mxu0
    %2257 = vmatprep.mubr.bf16.mxu0 0
    %2258 = vmatmul.mubr.bf16.gmra.mrb[0].mxu0 %v2148
    %v2259 = vpop.f32.mrb[0].mxu0
    %v2260 = vadd.f32 %v2167, %v2259
    %v2261 = vpop.f32.mrb[0].mxu0
    %v2262 = vpop.f32.mrb[0].mxu0
    %v2263 = vadd.f32 %v2167, %v2262
    %v2264 = vpop.f32.mrb[0].mxu0
    %2265 = vmatprep.mubr.bf16.mxu0 0
    %2266 = vmatmul.mubr.bf16.gmra.mrb[0].mxu0 %v2149
    %v2267 = vpop.f32.mrb[0].mxu0
    %v2268 = vadd.f32 %v2167, %v2267
    %v2269 = vpop.f32.mrb[0].mxu0
    %v2270 = vpop.f32.mrb[0].mxu0
    %v2271 = vadd.f32 %v2167, %v2270
    %v2272 = vpop.f32.mrb[0].mxu0
    %2273 = vmatprep.mubr.bf16.mxu0 0
    %2274 = vmatmul.mubr.bf16.gmra.mrb[0].mxu0 %v2150
    %v2275 = vpop.f32.mrb[0].mxu0
    %v2276 = vadd.f32 %v2167, %v2275
    %v2277 = vpop.f32.mrb[0].mxu0
    %v2278 = vpop.f32.mrb[0].mxu0
    %v2279 = vadd.f32 %v2167, %v2278
    %v2280 = vpop.f32.mrb[0].mxu0
    %2281 = vmatprep.mubr.bf16.mxu0 0
    %2282 = vmatmul.mubr.bf16.gmra.mrb[0].mxu0 %v2151
    %v2283 = vpop.f32.mrb[0].mxu0
    %v2284 = vadd.f32 %v2167, %v2283
    %v2285 = vpop.f32.mrb[0].mxu0
    %v2286 = vpop.f32.mrb[0].mxu0
    %v2287 = vadd.f32 %v2167, %v2286
    %v2288 = vpop.f32.mrb[0].mxu0
    %2289 = vmatprep.mubr.bf16.mxu0 0
    %2290 = vmatmul.mubr.bf16.gmra.mrb[0].mxu0 %v2152
    %v2291 = vpop.f32.mrb[0].mxu0
    %v2292 = vadd.f32 %v2167, %v2291
    %v2293 = vpop.f32.mrb[0].mxu0
    %v2294 = vpop.f32.mrb[0].mxu0
    %v2295 = vadd.f32 %v2167, %v2294
    %v2296 = vpop.f32.mrb[0].mxu0
    %2297 = vmatprep.mubr.bf16.mxu0 0
    %2298 = vmatmul.mubr.bf16.gmra.mrb[0].mxu0 %v2153
    %v2299 = vpop.f32.mrb[0].mxu0
    %v2300 = vadd.f32 %v2167, %v2299
    %v2301 = vpop.f32.mrb[0].mxu0
    %v2302 = vpop.f32.mrb[0].mxu0
    %v2303 = vadd.f32 %v2167, %v2302
    %v2304 = vpop.f32.mrb[0].mxu0
    %2305 = vmatprep.mubr.bf16.mxu0 0
    %2306 = vmatmul.mubr.bf16.gmra.mrb[0].mxu0 %v2154
    %v2307 = vpop.f32.mrb[0].mxu0
    %v2308 = vadd.f32 %v2167, %v2307
    %v2309 = vpop.f32.mrb[0].mxu0
    %v2310 = vpop.f32.mrb[0].mxu0
    %v2311 = vadd.f32 %v2167, %v2310
    %v2312 = vpop.f32.mrb[0].mxu0
    %2313 = vmatprep.mubr.bf16.mxu0 0
    %2314 = vmatmul.mubr.bf16.gmra.mrb[0].mxu0 %v2155
    %v2315 = vpop.f32.mrb[0].mxu0
    %v2316 = vadd.f32 %v2167, %v2315
    %v2317 = vpop.f32.mrb[0].mxu0
    %v2318 = vpop.f32.mrb[0].mxu0
    %v2319 = vadd.f32 %v2167, %v2318
    %v2320 = vpop.f32.mrb[0].mxu0
    %2321 = vmatprep.mubr.bf16.mxu0 0
    %2322 = vmatmul.mubr.bf16.gmra.mrb[0].mxu0 %v2156
    %v2323 = vpop.f32.mrb[0].mxu0
    %v2324 = vadd.f32 %v2167, %v2323
    %v2325 = vpop.f32.mrb[0].mxu0
    %v2326 = vpop.f32.mrb[0].mxu0
    %v2327 = vadd.f32 %v2167, %v2326
    %v2328 = vpop.f32.mrb[0].mxu0
    %2329 = vmatprep.mubr.bf16.mxu0 0
    %2330 = vmatmul.mubr.bf16.gmra.mrb[0].mxu0 %v2157
    %v2331 = vpop.f32.mrb[0].mxu0
    %v2332 = vadd.f32 %v2167, %v2331
    %v2333 = vpop.f32.mrb[0].mxu0
    %v2334 = vpop.f32.mrb[0].mxu0
    %v2335 = vadd.f32 %v2167, %v2334
    %v2336 = vpop.f32.mrb[0].mxu0
    %2337 = vmatprep.mubr.bf16.mxu0 0
    %2338 = vmatmul.mubr.bf16.gmra.mrb[0].mxu0 %v2158
    %v2339 = vpop.f32.mrb[0].mxu0
    %v2340 = vadd.f32 %v2167, %v2339
    %v2341 = vpop.f32.mrb[0].mxu0
    %v2342 = vpop.f32.mrb[0].mxu0
    %v2343 = vadd.f32 %v2167, %v2342
    %v2344 = vpop.f32.mrb[0].mxu0
    %2345 = vmatprep.mubr.bf16.mxu0 0
    %2346 = vmatmul.mubr.bf16.gmra.mrb[0].mxu0 %v2159
    %v2347 = vpop.f32.mrb[0].mxu0
    %v2348 = vadd.f32 %v2167, %v2347
    %v2349 = vpop.f32.mrb[0].mxu0
    %v2350 = vpop.f32.mrb[0].mxu0
    %v2351 = vadd.f32 %v2167, %v2350
    %v2352 = vpop.f32.mrb[0].mxu0
    %2353 = vmatprep.mubr.bf16.mxu0 0
    %2354 = vmatmul.mubr.bf16.gmra.mrb[0].mxu0 %v2160
    %v2355 = vpop.f32.mrb[0].mxu0
    %v2356 = vadd.f32 %v2167, %v2355
    %v2357 = vpop.f32.mrb[0].mxu0
    %v2358 = vpop.f32.mrb[0].mxu0
    %v2359 = vadd.f32 %v2167, %v2358
    %v2360 = vpop.f32.mrb[0].mxu0
    %2361 = vmatprep.mubr.bf16.mxu0 0
    %2362 = vmatmul.mubr.bf16.gmra.mrb[0].mxu0 %v2161
    %v2363 = vpop.f32.mrb[0].mxu0
    %v2364 = vadd.f32 %v2167, %v2363
    %v2365 = vpop.f32.mrb[0].mxu0
    %v2366 = vpop.f32.mrb[0].mxu0
    %v2367 = vadd.f32 %v2167, %v2366
    %v2368 = vpop.f32.mrb[0].mxu0
    %2369 = vmatprep.mubr.bf16.mxu0 0
    %2370 = vmatmul.mubr.bf16.gmra.mrb[0].mxu0 %v2162
    %v2371 = vpop.f32.mrb[0].mxu0
    %v2372 = vadd.f32 %v2167, %v2371
    %v2373 = vpop.f32.mrb[0].mxu0
    %v2374 = vpop.f32.mrb[0].mxu0
    %v2375 = vadd.f32 %v2167, %v2374
    %v2376 = vpop.f32.mrb[0].mxu0
    %2377 = vdwg.mxu0
    %v2378 = vpack.c.bf16 %v2255, %v2252
    %v2379 = vpack.c.bf16 %v2263, %v2260
    %v2380 = vpack.c.bf16 %v2271, %v2268
    %v2381 = vpack.c.bf16 %v2279, %v2276
    %v2382 = vpack.c.bf16 %v2287, %v2284
    %v2383 = vpack.c.bf16 %v2295, %v2292
    %v2384 = vpack.c.bf16 %v2303, %v2300
    %v2385 = vpack.c.bf16 %v2311, %v2308
    %v2386 = vpack.c.bf16 %v2319, %v2316
    %v2387 = vpack.c.bf16 %v2327, %v2324
    %v2388 = vpack.c.bf16 %v2335, %v2332
    %v2389 = vpack.c.bf16 %v2343, %v2340
    %v2390 = vpack.c.bf16 %v2351, %v2348
    %v2391 = vpack.c.bf16 %v2359, %v2356
    %v2392 = vpack.c.bf16 %v2367, %v2364
    %v2393 = vpack.c.bf16 %v2375, %v2372
    %v2395 = vlaneseq
    %v2396 = vshrl.u32 %v2395, 7
    %v2397 = vsub.s32 0, %v2396
    %v2398 = vrot.slane %v1985, %v2397
    %v2416 = vunpack.c.l.b16 %v1969
    %v2417 = vunpack.c.l.b16 %v1970
    %v2418 = vunpack.c.l.b16 %v1971
    %v2419 = vunpack.c.l.b16 %v1972
    %v2420 = vunpack.c.l.b16 %v1973
    %v2421 = vunpack.c.l.b16 %v1974
    %v2422 = vunpack.c.l.b16 %v1975
    %v2423 = vunpack.c.l.b16 %v1976
    %v2424 = vunpack.c.l.b16 %v1977
    %v2425 = vunpack.c.l.b16 %v1978
    %v2426 = vunpack.c.l.b16 %v1979
    %v2427 = vunpack.c.l.b16 %v1980
    %v2428 = vunpack.c.l.b16 %v1981
    %v2429 = vunpack.c.l.b16 %v1982
    %v2430 = vunpack.c.l.b16 %v1983
    %v2431 = vunpack.c.l.b16 %v1984
    %v2432 = vpack.c.b16 %v2417, %v2416
    %v2433 = vpack.c.b16 %v2419, %v2418
    %v2434 = vpack.c.b16 %v2421, %v2420
    %v2435 = vpack.c.b16 %v2423, %v2422
    %v2436 = vpack.c.b16 %v2425, %v2424
    %v2437 = vpack.c.b16 %v2427, %v2426
    %v2438 = vpack.c.b16 %v2429, %v2428
    %v2439 = vpack.c.b16 %v2431, %v2430
    %2448 = vmatprep.subr.bf16.mxu0 0
    %2449 = vmatpush1.bf16.msra.mxu0 %v2432
    %2450 = vmatprep.subr.bf16.mxu0 0
    %2451 = vmatpush1.bf16.msra.mxu0 %v2433
    %2452 = vmatprep.subr.bf16.mxu0 0
    %2453 = vmatpush1.bf16.msra.mxu0 %v2434
    %2454 = vmatprep.subr.bf16.mxu0 0
    %2455 = vmatpush1.bf16.msra.mxu0 %v2435
    %2456 = vmatprep.subr.bf16.mxu0 0
    %2457 = vmatpush1.bf16.msra.mxu0 %v2436
    %2458 = vmatprep.subr.bf16.mxu0 0
    %2459 = vmatpush1.bf16.msra.mxu0 %v2437
    %2460 = vmatprep.subr.bf16.mxu0 0
    %2461 = vmatpush1.bf16.msra.mxu0 %v2438
    %2462 = vmatprep.subr.bf16.mxu0 0
    %2463 = vmatpush1.bf16.msra.mxu0 %v2439
    %2464 = vmatprep.subr.bf16.mxu0 0
    %2465 = vmatpush1.bf16.msra.mxu0 0
    %2466 = vmatprep.subr.bf16.mxu0 0
    %2467 = vmatpush1.bf16.msra.mxu0 0
    %2468 = vmatprep.subr.bf16.mxu0 0
    %2469 = vmatpush1.bf16.msra.mxu0 0
    %2470 = vmatprep.subr.bf16.mxu0 0
    %2471 = vmatpush1.bf16.msra.mxu0 0
    %2472 = vmatprep.subr.bf16.mxu0 0
    %2473 = vmatpush1.bf16.msra.mxu0 0
    %2474 = vmatprep.subr.bf16.mxu0 0
    %2475 = vmatpush1.bf16.msra.mxu0 0
    %2476 = vmatprep.subr.bf16.mxu0 0
    %2477 = vmatpush1.bf16.msra.mxu0 0
    %2478 = vmatprep.subr.bf16.mxu0 0
    %2479 = vmatpush1.bf16.msra.mxu0 0
    %2480 = vmatprep.mubr.bf16.mxu0 0
    %2481 = vmatmul.mubr.bf16.gmra.mrb[0].mxu0 %v2378
    %v2482 = vpop.f32.mrb[0].mxu0
    %v2483 = vadd.f32 %v2398, %v2482
    %v2484 = vpop.f32.mrb[0].mxu0
    %v2485 = vpop.f32.mrb[0].mxu0
    %v2486 = vadd.f32 %v2398, %v2485
    %v2487 = vpop.f32.mrb[0].mxu0
    %2488 = vmatprep.mubr.bf16.mxu0 0
    %2489 = vmatmul.mubr.bf16.gmra.mrb[0].mxu0 %v2379
    %v2490 = vpop.f32.mrb[0].mxu0
    %v2491 = vadd.f32 %v2398, %v2490
    %v2492 = vpop.f32.mrb[0].mxu0
    %v2493 = vpop.f32.mrb[0].mxu0
    %v2494 = vadd.f32 %v2398, %v2493
    %v2495 = vpop.f32.mrb[0].mxu0
    %2496 = vmatprep.mubr.bf16.mxu0 0
    %2497 = vmatmul.mubr.bf16.gmra.mrb[0].mxu0 %v2380
    %v2498 = vpop.f32.mrb[0].mxu0
    %v2499 = vadd.f32 %v2398, %v2498
    %v2500 = vpop.f32.mrb[0].mxu0
    %v2501 = vpop.f32.mrb[0].mxu0
    %v2502 = vadd.f32 %v2398, %v2501
    %v2503 = vpop.f32.mrb[0].mxu0
    %2504 = vmatprep.mubr.bf16.mxu0 0
    %2505 = vmatmul.mubr.bf16.gmra.mrb[0].mxu0 %v2381
    %v2506 = vpop.f32.mrb[0].mxu0
    %v2507 = vadd.f32 %v2398, %v2506
    %v2508 = vpop.f32.mrb[0].mxu0
    %v2509 = vpop.f32.mrb[0].mxu0
    %v2510 = vadd.f32 %v2398, %v2509
    %v2511 = vpop.f32.mrb[0].mxu0
    %2512 = vmatprep.mubr.bf16.mxu0 0
    %2513 = vmatmul.mubr.bf16.gmra.mrb[0].mxu0 %v2382
    %v2514 = vpop.f32.mrb[0].mxu0
    %v2515 = vadd.f32 %v2398, %v2514
    %v2516 = vpop.f32.mrb[0].mxu0
    %v2517 = vpop.f32.mrb[0].mxu0
    %v2518 = vadd.f32 %v2398, %v2517
    %v2519 = vpop.f32.mrb[0].mxu0
    %2520 = vmatprep.mubr.bf16.mxu0 0
    %2521 = vmatmul.mubr.bf16.gmra.mrb[0].mxu0 %v2383
    %v2522 = vpop.f32.mrb[0].mxu0
    %v2523 = vadd.f32 %v2398, %v2522
    %v2524 = vpop.f32.mrb[0].mxu0
    %v2525 = vpop.f32.mrb[0].mxu0
    %v2526 = vadd.f32 %v2398, %v2525
    %v2527 = vpop.f32.mrb[0].mxu0
    %2528 = vmatprep.mubr.bf16.mxu0 0
    %2529 = vmatmul.mubr.bf16.gmra.mrb[0].mxu0 %v2384
    %v2530 = vpop.f32.mrb[0].mxu0
    %v2531 = vadd.f32 %v2398, %v2530
    %v2532 = vpop.f32.mrb[0].mxu0
    %v2533 = vpop.f32.mrb[0].mxu0
    %v2534 = vadd.f32 %v2398, %v2533
    %v2535 = vpop.f32.mrb[0].mxu0
    %2536 = vmatprep.mubr.bf16.mxu0 0
    %2537 = vmatmul.mubr.bf16.gmra.mrb[0].mxu0 %v2385
    %v2538 = vpop.f32.mrb[0].mxu0
    %v2539 = vadd.f32 %v2398, %v2538
    %v2540 = vpop.f32.mrb[0].mxu0
    %v2541 = vpop.f32.mrb[0].mxu0
    %v2542 = vadd.f32 %v2398, %v2541
    %v2543 = vpop.f32.mrb[0].mxu0
    %2544 = vmatprep.mubr.bf16.mxu0 0
    %2545 = vmatmul.mubr.bf16.gmra.mrb[0].mxu0 %v2386
    %v2546 = vpop.f32.mrb[0].mxu0
    %v2547 = vadd.f32 %v2398, %v2546
    %v2548 = vpop.f32.mrb[0].mxu0
    %v2549 = vpop.f32.mrb[0].mxu0
    %v2550 = vadd.f32 %v2398, %v2549
    %v2551 = vpop.f32.mrb[0].mxu0
    %2552 = vmatprep.mubr.bf16.mxu0 0
    %2553 = vmatmul.mubr.bf16.gmra.mrb[0].mxu0 %v2387
    %v2554 = vpop.f32.mrb[0].mxu0
    %v2555 = vadd.f32 %v2398, %v2554
    %v2556 = vpop.f32.mrb[0].mxu0
    %v2557 = vpop.f32.mrb[0].mxu0
    %v2558 = vadd.f32 %v2398, %v2557
    %v2559 = vpop.f32.mrb[0].mxu0
    %2560 = vmatprep.mubr.bf16.mxu0 0
    %2561 = vmatmul.mubr.bf16.gmra.mrb[0].mxu0 %v2388
    %v2562 = vpop.f32.mrb[0].mxu0
    %v2563 = vadd.f32 %v2398, %v2562
    %v2564 = vpop.f32.mrb[0].mxu0
    %v2565 = vpop.f32.mrb[0].mxu0
    %v2566 = vadd.f32 %v2398, %v2565
    %v2567 = vpop.f32.mrb[0].mxu0
    %2568 = vmatprep.mubr.bf16.mxu0 0
    %2569 = vmatmul.mubr.bf16.gmra.mrb[0].mxu0 %v2389
    %v2570 = vpop.f32.mrb[0].mxu0
    %v2571 = vadd.f32 %v2398, %v2570
    %v2572 = vpop.f32.mrb[0].mxu0
    %v2573 = vpop.f32.mrb[0].mxu0
    %v2574 = vadd.f32 %v2398, %v2573
    %v2575 = vpop.f32.mrb[0].mxu0
    %2576 = vmatprep.mubr.bf16.mxu0 0
    %2577 = vmatmul.mubr.bf16.gmra.mrb[0].mxu0 %v2390
    %v2578 = vpop.f32.mrb[0].mxu0
    %v2579 = vadd.f32 %v2398, %v2578
    %v2580 = vpop.f32.mrb[0].mxu0
    %v2581 = vpop.f32.mrb[0].mxu0
    %v2582 = vadd.f32 %v2398, %v2581
    %v2583 = vpop.f32.mrb[0].mxu0
    %2584 = vmatprep.mubr.bf16.mxu0 0
    %2585 = vmatmul.mubr.bf16.gmra.mrb[0].mxu0 %v2391
    %v2586 = vpop.f32.mrb[0].mxu0
    %v2587 = vadd.f32 %v2398, %v2586
    %v2588 = vpop.f32.mrb[0].mxu0
    %v2589 = vpop.f32.mrb[0].mxu0
    %v2590 = vadd.f32 %v2398, %v2589
    %v2591 = vpop.f32.mrb[0].mxu0
    %2592 = vmatprep.mubr.bf16.mxu0 0
    %2593 = vmatmul.mubr.bf16.gmra.mrb[0].mxu0 %v2392
    %v2594 = vpop.f32.mrb[0].mxu0
    %v2595 = vadd.f32 %v2398, %v2594
    %v2596 = vpop.f32.mrb[0].mxu0
    %v2597 = vpop.f32.mrb[0].mxu0
    %v2598 = vadd.f32 %v2398, %v2597
    %v2599 = vpop.f32.mrb[0].mxu0
    %2600 = vmatprep.mubr.bf16.mxu0 0
    %2601 = vmatmul.mubr.bf16.gmra.mrb[0].mxu0 %v2393
    %v2602 = vpop.f32.mrb[0].mxu0
    %v2603 = vadd.f32 %v2398, %v2602
    %v2604 = vpop.f32.mrb[0].mxu0
    %v2605 = vpop.f32.mrb[0].mxu0
    %v2606 = vadd.f32 %v2398, %v2605
    %v2607 = vpop.f32.mrb[0].mxu0
    %2608 = vdwg.mxu0
    %2609 = vst [vmem:[#allocation16] sm:$0xff] %v2483
    %2610 = vst [vmem:[#allocation16 + $0x8] sm:$0xff] %v2486
    %2611 = vst [vmem:[#allocation16 + $0x10] sm:$0xff] %v2491
    %2612 = vst [vmem:[#allocation16 + $0x18] sm:$0xff] %v2494
    %2613 = vst [vmem:[#allocation16 + $0x20] sm:$0xff] %v2499
    %2614 = vst [vmem:[#allocation16 + $0x28] sm:$0xff] %v2502
    %2615 = vst [vmem:[#allocation16 + $0x30] sm:$0xff] %v2507
    %2616 = vst [vmem:[#allocation16 + $0x38] sm:$0xff] %v2510
    %2617 = vst [vmem:[#allocation16 + $0x40] sm:$0xff] %v2515
    %2618 = vst [vmem:[#allocation16 + $0x48] sm:$0xff] %v2518
    %2619 = vst [vmem:[#allocation16 + $0x50] sm:$0xff] %v2523
    %2620 = vst [vmem:[#allocation16 + $0x58] sm:$0xff] %v2526
    %2621 = vst [vmem:[#allocation16 + $0x60] sm:$0xff] %v2531
    %2622 = vst [vmem:[#allocation16 + $0x68] sm:$0xff] %v2534
    %2623 = vst [vmem:[#allocation16 + $0x70] sm:$0xff] %v2539
    %2624 = vst [vmem:[#allocation16 + $0x78] sm:$0xff] %v2542
    %2625 = vst [vmem:[#allocation16 + $0x80] sm:$0xff] %v2547
    %2626 = vst [vmem:[#allocation16 + $0x88] sm:$0xff] %v2550
    %2627 = vst [vmem:[#allocation16 + $0x90] sm:$0xff] %v2555
    %2628 = vst [vmem:[#allocation16 + $0x98] sm:$0xff] %v2558
    %2629 = vst [vmem:[#allocation16 + $0xa0] sm:$0xff] %v2563
    %2630 = vst [vmem:[#allocation16 + $0xa8] sm:$0xff] %v2566
    %2631 = vst [vmem:[#allocation16 + $0xb0] sm:$0xff] %v2571
    %2632 = vst [vmem:[#allocation16 + $0xb8] sm:$0xff] %v2574
    %2633 = vst [vmem:[#allocation16 + $0xc0] sm:$0xff] %v2579
    %2634 = vst [vmem:[#allocation16 + $0xc8] sm:$0xff] %v2582
    %2635 = vst [vmem:[#allocation16 + $0xd0] sm:$0xff] %v2587
    %2636 = vst [vmem:[#allocation16 + $0xd8] sm:$0xff] %v2590
    %2637 = vst [vmem:[#allocation16 + $0xe0] sm:$0xff] %v2595
    %2638 = vst [vmem:[#allocation16 + $0xe8] sm:$0xff] %v2598
    %2639 = vst [vmem:[#allocation16 + $0xf0] sm:$0xff] %v2603
    %2640 = vst [vmem:[#allocation16 + $0xf8] sm:$0xff] %v2606
    // Predicated region
    $region90: #{tpu_custom_call.1} parent=1 // pred_check
      _
    $region91: #{tpu_custom_call.1} parent=1 // pred_check_branch
      %2642 = sbr.rel (0) target = $region93
    $region92: #{tpu_custom_call.1} parent=1 // pred_region
      %s2644 = ssub.s32 4096, 4096
      %2645 = vsyncadd [#allocation4], %s2644
      %s2646 = sshll.u32 [#allocation16], 4
      %s2647 = int_to_ptr.vmem [resolvable:$true] %s2646
      %2652 = dma.vmem_to_hbm [thread:$0]  %s2647, 4096, %s14, [#allocation4], 128, 128, 8
    $region93: #{tpu_custom_call.1} parent=1 // pred_fallthru
      _
    // Predicated region
    $region94: #{tpu_custom_call.1} parent=1 // pred_check
      _
    $region95: #{tpu_custom_call.1} parent=1 // pred_check_branch
      %2654 = sbr.rel (0) target = $region97
    $region96: #{tpu_custom_call.1} parent=1 // pred_region
      %2655 = dma.done [#allocation4], 4096
    $region97: #{tpu_custom_call.1} parent=1 // pred_fallthru
      _
    %2656 = vsyncpa [#allocation3], 1
    %2657 = vsyncpa [#allocation6], 1
    %2658 = vsyncpa [#allocation9], 1
    %2659 = vsyncpa [#allocation12], 1
    %2660 = vsyncpa [#allocation15], 1
    %2661 = vsyncpa [#allocation4], 1

</llo_original>
